<compile_context>
chip_gen: v5e
topology: v5e:2x2
jax: 0.10.0
libtpu: 0.0.40
codegen_flags: <defaults>
</compile_context>

<pallas_src>
import math

import jax
import jax.numpy as jnp
from jax.experimental import pallas as pl
from jax.experimental.pallas import tpu as pltpu

C = 128   # all conv channel dims are zero-padded to 128 lanes
K = 4     # conv kernel size


# ------------------------------ fused kernel ---------------------------------

def fused_cnn_kernel(x_ref, w1_ref, b1_ref, w2_ref, b2_ref, w3_ref, b3_ref,
                     w4_ref, b4_ref, wf1_ref, bf1_ref, wf2_ref, bf2_ref,
                     o_ref, pad_ref, col_ref, flat_ref):
    """Whole network in one launch; activations stay in vregs / VMEM scratch.

    x_ref   : (Bb, L, 1)         input window, channels-last
    w1_ref  : (K, 1, 128)        conv1 taps (VPU broadcast-FMA path, Cin=1)
    w{2,3,4}: (K*128, 128)       im2col-folded conv weights, channel-padded to 128
    b*_ref  : (1, 128)
    wf1_ref : (L*128, 64)        fc1, rows permuted+padded to the kernel's
                                 time-major 128-channel flatten
    wf2_ref : (1, 64)            fc2 as a single weight row (VPU reduce)
    o_ref   : (Bb, 1)
    pad_ref : (Bb, L+K-1, 128)   zero-halo padded-activation scratch
    col_ref : (Bb, L, K*128)     im2col column scratch
    flat_ref: (Bb, L*128)        lane-dense flatten scratch
    """
    Bb, L, _ = x_ref.shape

    # Zero ONLY the halo rows (full 128 lanes).  Interior rows [1, L] are fully
    # rewritten (all 128 lanes) by every layer, so they never need zeroing.
    pad_ref[:, 0:1, :] = jnp.zeros((Bb, 1, C), jnp.float32)
    pad_ref[:, L + 1:L + K - 1, :] = jnp.zeros((Bb, K - 2, C), jnp.float32)

    # ---- conv1 (Cin=1): lane-broadcast x once (full-lane store), then K
    # shifted full-lane slices * per-tap weight rows on the VPU.  No masked
    # 1-lane VMEM traffic; MXU left idle for this degenerate-K layer.
    pad_ref[:, 1:L + 1, :] = x_ref[...] * jnp.ones((1, 1, C), jnp.float32)
    acc = pad_ref[:, 0:L, :] * w1_ref[0]
    for j in range(1, K):
        acc = acc + pad_ref[:, j:j + L, :] * w1_ref[j]        # (Bb,L,128)*(1,128)
    h = jnp.maximum(acc + b1_ref[...], 0.0)                   # (Bb, L, 128)

    # ---- conv2..conv4: im2col -> one deep-K MXU matmul per layer.  With all
    # channels padded to 128, every pack write and matmul output is a full,
    # lane-aligned 128-wide unmasked store.
    def conv_block(h, w_ref, b_ref):
        pad_ref[:, 1:L + 1, :] = h
        for j in range(K):                                     # pack K shifted slices
            col_ref[:, :, j * C:(j + 1) * C] = pad_ref[:, j:j + L, :]
        y = jax.lax.dot_general(
            col_ref[...], w_ref[...],
            dimension_numbers=(((2,), (0,)), ((), ())),
            preferred_element_type=jnp.float32)                # (Bb, L, 128)
        return jnp.maximum(y + b_ref[...], 0.0)

    h = conv_block(h, w2_ref, b2_ref)                          # (Bb, L, 128)
    h = conv_block(h, w3_ref, b3_ref)                          # (Bb, L, 128) (64 real)
    h = conv_block(h, w4_ref, b4_ref)                          # (Bb, L, 128) (32 real)

    # ---- flatten, time-major with 128-padded channels: every store is a full
    # 128-lane unmasked vst at a 128-aligned lane offset.
    # TODO(synk): a single h.reshape(Bb, L*128) (sublane->lane relayout) would
    # also remove the L sublane extracts once Mosaic reshape support allows it.
    for t in range(L):
        flat_ref[:, t * C:(t + 1) * C] = h[:, t, :]

    # ---- fc1 on the MXU, fc2 on the VPU (multiply by weight row + lane reduce)
    z = jnp.dot(flat_ref[...], wf1_ref[...],
                preferred_element_type=jnp.float32) + bf1_ref[...]
    z = jnp.maximum(z, 0.0)                                    # (Bb, 64)
    o_ref[...] = jnp.sum(z * wf2_ref[...], axis=-1, keepdims=True) + bf2_ref[...]


# --------------------------------- wrapper ------------------------------------

def cnn_forward(x_ncl, kp, *, batch_block=None):
    """x_ncl: (B, 1, L) float32 (PyTorch NCL layout); kp: prepared kernel params.

    batch_block: optional batch tile.  Default (None) keeps one block (grid=1);
    for large serving batches pick a multiple of 8 so M = bb*L fills the MXU and
    the grid has >=2 steps for v7x megacore sharding.
    """
    B, cin0, L = x_ncl.shape
    assert cin0 == 1
    x_blc = jnp.transpose(x_ncl, (0, 2, 1)).astype(jnp.float32)     # (B, L, 1)

    bb = B if batch_block is None else min(batch_block, B)
    assert B % bb == 0
    grid = (B // bb,)

    weights = [kp["w1c"], kp["b1c"], kp["w2c"], kp["b2c"], kp["w3c"], kp["b3c"],
               kp["w4c"], kp["b4c"], kp["wf1"], kp["bf1"], kp["wf2"], kp["bf2"]]

    # Replicated (grid-invariant) weight blocks.  NOTE: despite the constant
    # index_map they are still double-buffered (~2 x 1.3 MB) -- irrelevant
    # against 64-128 MiB VMEM at these sizes.
    def rep_spec(shape):
        n = len(shape)
        return pl.BlockSpec(shape, lambda i, n=n: (0,) * n)

    in_specs = ([pl.BlockSpec((bb, L, 1), lambda i: (i, 0, 0))]
                + [rep_spec(w.shape) for w in weights])
    out_specs = pl.BlockSpec((bb, 1), lambda i: (i, 0))

    return pl.pallas_call(
        fused_cnn_kernel,
        out_shape=jax.ShapeDtypeStruct((B, 1), jnp.float32),
        grid=grid,
        in_specs=in_specs,
        out_specs=out_specs,
        scratch_shapes=[
            pltpu.VMEM((bb, L + K - 1, C), jnp.float32),   # zero-halo padded activations
            pltpu.VMEM((bb, L, K * C), jnp.float32),       # im2col columns
            pltpu.VMEM((bb, L * C), jnp.float32),          # lane-dense flatten
        ],
        compiler_params=pltpu.CompilerParams(dimension_semantics=("parallel",)),
    )(x_blc, *weights)


# ------------------------- one-time parameter preparation ----------------------

def prepare_params(params, window_size):
    """Hoist all layout transposes / zero-padding out of the forward path."""
    (w1, b1), (w2, b2), (w3, b3), (w4, b4) = params["convs"]
    wf1, bf1 = params["fc1"]
    wf2, bf2 = params["fc2"]
    L = window_size

    def conv_im2col_padded(w):
        # (Cout, Cin, K) -> (K*128, 128); row = j*128 + cin, channels zero-padded.
        cout, cin, k = w.shape
        wt = jnp.transpose(w, (2, 1, 0))                              # (K, Cin, Cout)
        wt = jnp.pad(wt, ((0, 0), (0, C - cin), (0, C - cout)))       # (K, 128, 128)
        return wt.reshape(k * C, C)

    def pad_bias(b):
        return jnp.pad(b, (0, C - b.shape[0])).reshape(1, C)

    # fc1: PyTorch flattens channel-major (f = c*L + t); the kernel flattens
    # time-major with 128-padded channels (g = t*128 + c).  Permute + pad once:
    # wf1p[t*128 + c, o] = wf1[o, c*L + t] for c < 32, 0 otherwise.
    out_f, in_f = wf1.shape                                           # (64, 32*L)
    c4 = in_f // L                                                    # 32
    wf1_t = jnp.transpose(wf1.reshape(out_f, c4, L), (2, 1, 0))       # (L, 32, 64)
    wf1_p = jnp.pad(wf1_t, ((0, 0), (0, C - c4), (0, 0)))             # (L, 128, 64)
    wf1_p = wf1_p.reshape(L * C, out_f)

    return {
        "w1c": jnp.transpose(w1, (2, 1, 0)),                          # (K, 1, 128)
        "b1c": b1.reshape(1, -1),
        "w2c": conv_im2col_padded(w2), "b2c": pad_bias(b2),
        "w3c": conv_im2col_padded(w3), "b3c": pad_bias(b3),
        "w4c": conv_im2col_padded(w4), "b4c": pad_bias(b4),
        "wf1": wf1_p, "bf1": bf1.reshape(1, -1),
        "wf2": wf2.reshape(1, -1),                                    # (1, 64) VPU row
        "bf2": bf2.reshape(1, -1),
    }


# ------------------------------ param init (PyTorch layout) --------------------

def init_params(window_size):
    key = jax.random.PRNGKey(0)
    keys = jax.random.split(key, 12)

    def conv_init(kw, kb, cout, cin, k):
        scale = 1.0 / math.sqrt(cin * k)
        w = jax.random.uniform(kw, (cout, cin, k), jnp.float32, -scale, scale)
        b = jax.random.uniform(kb, (cout,), jnp.float32, -scale, scale)
        return w, b

    def linear_init(kw, kb, out_f, in_f):
        scale = 1.0 / math.sqrt(in_f)
        w = jax.random.uniform(kw, (out_f, in_f), jnp.float32, -scale, scale)
        b = jax.random.uniform(kb, (out_f,), jnp.float32, -scale, scale)
        return w, b

    convs = [
        conv_init(keys[0], keys[1], 128, 1, 4),
        conv_init(keys[2], keys[3], 128, 128, 4),
        conv_init(keys[4], keys[5], 64, 128, 4),
        conv_init(keys[6], keys[7], 32, 64, 4),
    ]
    fc1 = linear_init(keys[8], keys[9], 64, 32 * window_size)
    fc2 = linear_init(keys[10], keys[11], 1, 64)
    return {"convs": convs, "fc1": fc1, "fc2": fc2}


# ------------------------------- pure-JAX reference -----------------------------

def reference_forward(x_ncl, params):
    h = x_ncl                                               # (B, C, L)
    for w, b in params["convs"]:
        k = w.shape[2]
        L = h.shape[2]
        pl_, pr_ = (k - 1) // 2, (k - 1) - (k - 1) // 2     # PyTorch 'same' for k=4: (1, 2)
        hp = jnp.pad(h, ((0, 0), (0, 0), (pl_, pr_)))
        taps = jnp.stack([hp[:, :, j:j + L] for j in range(k)], axis=-1)   # (B,Cin,L,K)
        h = jnp.einsum("bclk,ock->bol", taps, w, precision="highest") + b[None, :, None]
        h = jnp.maximum(h, 0.0)
    flat = h.reshape(h.shape[0], -1)                        # channel-major, like x.view(B,-1)
    w1, b1 = params["fc1"]
    w2, b2 = params["fc2"]
    z = jnp.maximum(jnp.dot(flat, w1.T, precision="highest") + b1, 0.0)
    return jnp.dot(z, w2.T, precision="highest") + b2


# ----------------------------------- main ---------------------------------------

if __name__ == "__main__":
    window_size = 16
    batch = 2

    params = init_params(window_size)                 # PyTorch-layout params
    kparams = prepare_params(params, window_size)     # one-time kernel-layout prep

    x = jax.random.normal(jax.random.PRNGKey(0), (batch, 1, window_size), jnp.float32)

    fwd = jax.jit(lambda xx: cnn_forward(xx, kparams))
    out = jax.block_until_ready(fwd(x))
    assert out.shape == (batch, 1) and out.dtype == jnp.float32

    ref = reference_forward(x, params)
    err = float(jnp.max(jnp.abs(out - ref)))
    assert err < 1e-3, f"mismatch vs pure-JAX reference: {err}"

    print("KERNEL_OK")
</pallas_src>

<mosaic_0001>
module attributes {stable_mosaic.version = 11 : i64} {
  func.func @fused_cnn_kernel(%arg0: i32, %arg1: memref<2x16x1xf32, #tpu.memory_space<vmem>>, %arg2: memref<4x1x128xf32, #tpu.memory_space<vmem>>, %arg3: memref<1x128xf32, #tpu.memory_space<vmem>>, %arg4: memref<512x128xf32, #tpu.memory_space<vmem>>, %arg5: memref<1x128xf32, #tpu.memory_space<vmem>>, %arg6: memref<512x128xf32, #tpu.memory_space<vmem>>, %arg7: memref<1x128xf32, #tpu.memory_space<vmem>>, %arg8: memref<512x128xf32, #tpu.memory_space<vmem>>, %arg9: memref<1x128xf32, #tpu.memory_space<vmem>>, %arg10: memref<2048x64xf32, #tpu.memory_space<vmem>>, %arg11: memref<1x64xf32, #tpu.memory_space<vmem>>, %arg12: memref<1x64xf32, #tpu.memory_space<vmem>>, %arg13: memref<1x1xf32, #tpu.memory_space<vmem>>, %arg14: memref<2x1xf32, #tpu.memory_space<vmem>>, %arg15: memref<2x19x128xf32, #tpu.memory_space<vmem>>, %arg16: memref<2x16x512xf32, #tpu.memory_space<vmem>>, %arg17: memref<2x2048xf32, #tpu.memory_space<vmem>>) attributes {dimension_semantics = [#tpu.dimension_semantics<parallel>], iteration_bounds = array<i64: 1>, scalar_prefetch = 0 : i64, scratch_operands = 3 : i64, tpu.core_type = #tpu.core_type<tc>, window_params = [{transform_indices = @transform_0, window_bounds = array<i64: 2, 16, 1>}, {pipeline_mode = #tpu.pipeline_mode<synchronous>, transform_indices = @transform_1, window_bounds = array<i64: 4, 1, 128>}, {pipeline_mode = #tpu.pipeline_mode<synchronous>, transform_indices = @transform_2, window_bounds = array<i64: 1, 128>}, {pipeline_mode = #tpu.pipeline_mode<synchronous>, transform_indices = @transform_3, window_bounds = array<i64: 512, 128>}, {pipeline_mode = #tpu.pipeline_mode<synchronous>, transform_indices = @transform_4, window_bounds = array<i64: 1, 128>}, {pipeline_mode = #tpu.pipeline_mode<synchronous>, transform_indices = @transform_5, window_bounds = array<i64: 512, 128>}, {pipeline_mode = #tpu.pipeline_mode<synchronous>, transform_indices = @transform_6, window_bounds = array<i64: 1, 128>}, {pipeline_mode = #tpu.pipeline_mode<synchronous>, transform_indices = @transform_7, window_bounds = array<i64: 512, 128>}, {pipeline_mode = #tpu.pipeline_mode<synchronous>, transform_indices = @transform_8, window_bounds = array<i64: 1, 128>}, {pipeline_mode = #tpu.pipeline_mode<synchronous>, transform_indices = @transform_9, window_bounds = array<i64: 2048, 64>}, {pipeline_mode = #tpu.pipeline_mode<synchronous>, transform_indices = @transform_10, window_bounds = array<i64: 1, 64>}, {pipeline_mode = #tpu.pipeline_mode<synchronous>, transform_indices = @transform_11, window_bounds = array<i64: 1, 64>}, {pipeline_mode = #tpu.pipeline_mode<synchronous>, transform_indices = @transform_12, window_bounds = array<i64: 1, 1>}, {transform_indices = @transform_13, window_bounds = array<i64: 2, 1>}]} {
    %cst = arith.constant 0.000000e+00 : f32
    %0 = vector.broadcast %cst : f32 to vector<2x1x128xf32>
    %c0 = arith.constant 0 : index
    %c0_0 = arith.constant 0 : index
    %c0_1 = arith.constant 0 : index
    %1 = vector.load %arg15[%c0, %c0_0, %c0_1] : memref<2x19x128xf32, #tpu.memory_space<vmem>>, vector<2x1x128xf32>
    tpu.vector_store %arg15[%c0, %c0_0, %c0_1], %0 {strides = array<i32>} : memref<2x19x128xf32, #tpu.memory_space<vmem>>, vector<2x1x128xf32>,
    %cst_2 = arith.constant 0.000000e+00 : f32
    %2 = vector.broadcast %cst_2 : f32 to vector<2x2x128xf32>
    %c0_3 = arith.constant 0 : index
    %c17 = arith.constant 17 : index
    %c0_4 = arith.constant 0 : index
    %3 = vector.load %arg15[%c0_3, %c17, %c0_4] : memref<2x19x128xf32, #tpu.memory_space<vmem>>, vector<2x2x128xf32>
    tpu.vector_store %arg15[%c0_3, %c17, %c0_4], %2 {strides = array<i32>} : memref<2x19x128xf32, #tpu.memory_space<vmem>>, vector<2x2x128xf32>,
    %c0_5 = arith.constant 0 : index
    %c0_6 = arith.constant 0 : index
    %c0_7 = arith.constant 0 : index
    %4 = vector.load %arg1[%c0_5, %c0_6, %c0_7] : memref<2x16x1xf32, #tpu.memory_space<vmem>>, vector<2x16x1xf32>
    %cst_8 = arith.constant 1.000000e+00 : f32
    %5 = vector.broadcast %cst_8 : f32 to vector<1x1x128xf32>
    %6 = vector.broadcast %4 : vector<2x16x1xf32> to vector<2x16x128xf32>
    %7 = vector.broadcast %5 : vector<1x1x128xf32> to vector<2x16x128xf32>
    %8 = arith.mulf %6, %7 : vector<2x16x128xf32>
    %c0_9 = arith.constant 0 : index
    %c1 = arith.constant 1 : index
    %c0_10 = arith.constant 0 : index
    %9 = vector.load %arg15[%c0_9, %c1, %c0_10] : memref<2x19x128xf32, #tpu.memory_space<vmem>>, vector<2x16x128xf32>
    tpu.vector_store %arg15[%c0_9, %c1, %c0_10], %8 {strides = array<i32>} : memref<2x19x128xf32, #tpu.memory_space<vmem>>, vector<2x16x128xf32>,
    %c0_11 = arith.constant 0 : index
    %c0_12 = arith.constant 0 : index
    %c0_13 = arith.constant 0 : index
    %10 = vector.load %arg15[%c0_11, %c0_12, %c0_13] : memref<2x19x128xf32, #tpu.memory_space<vmem>>, vector<2x16x128xf32>
    %c0_14 = arith.constant 0 : index
    %c0_15 = arith.constant 0 : index
    %c0_16 = arith.constant 0 : index
    %11 = vector.load %arg2[%c0_14, %c0_15, %c0_16] : memref<4x1x128xf32, #tpu.memory_space<vmem>>, vector<1x1x128xf32>
    %12 = vector.shape_cast %11 : vector<1x1x128xf32> to vector<1x128xf32>
    %13 = vector.shape_cast %12 : vector<1x128xf32> to vector<1x1x128xf32>
    %14 = vector.broadcast %13 : vector<1x1x128xf32> to vector<2x16x128xf32>
    %15 = arith.mulf %10, %14 : vector<2x16x128xf32>
    %c0_17 = arith.constant 0 : index
    %c1_18 = arith.constant 1 : index
    %c0_19 = arith.constant 0 : index
    %16 = vector.load %arg15[%c0_17, %c1_18, %c0_19] : memref<2x19x128xf32, #tpu.memory_space<vmem>>, vector<2x16x128xf32>
    %c1_20 = arith.constant 1 : index
    %c0_21 = arith.constant 0 : index
    %c0_22 = arith.constant 0 : index
    %17 = vector.load %arg2[%c1_20, %c0_21, %c0_22] : memref<4x1x128xf32, #tpu.memory_space<vmem>>, vector<1x1x128xf32>
    %18 = vector.shape_cast %17 : vector<1x1x128xf32> to vector<1x128xf32>
    %19 = vector.shape_cast %18 : vector<1x128xf32> to vector<1x1x128xf32>
    %20 = vector.broadcast %19 : vector<1x1x128xf32> to vector<2x16x128xf32>
    %21 = arith.mulf %16, %20 : vector<2x16x128xf32>
    %22 = arith.addf %15, %21 : vector<2x16x128xf32>
    %c0_23 = arith.constant 0 : index
    %c2 = arith.constant 2 : index
    %c0_24 = arith.constant 0 : index
    %23 = vector.load %arg15[%c0_23, %c2, %c0_24] : memref<2x19x128xf32, #tpu.memory_space<vmem>>, vector<2x16x128xf32>
    %c2_25 = arith.constant 2 : index
    %c0_26 = arith.constant 0 : index
    %c0_27 = arith.constant 0 : index
    %24 = vector.load %arg2[%c2_25, %c0_26, %c0_27] : memref<4x1x128xf32, #tpu.memory_space<vmem>>, vector<1x1x128xf32>
    %25 = vector.shape_cast %24 : vector<1x1x128xf32> to vector<1x128xf32>
    %26 = vector.shape_cast %25 : vector<1x128xf32> to vector<1x1x128xf32>
    %27 = vector.broadcast %26 : vector<1x1x128xf32> to vector<2x16x128xf32>
    %28 = arith.mulf %23, %27 : vector<2x16x128xf32>
    %29 = arith.addf %22, %28 : vector<2x16x128xf32>
    %c0_28 = arith.constant 0 : index
    %c3 = arith.constant 3 : index
    %c0_29 = arith.constant 0 : index
    %30 = vector.load %arg15[%c0_28, %c3, %c0_29] : memref<2x19x128xf32, #tpu.memory_space<vmem>>, vector<2x16x128xf32>
    %c3_30 = arith.constant 3 : index
    %c0_31 = arith.constant 0 : index
    %c0_32 = arith.constant 0 : index
    %31 = vector.load %arg2[%c3_30, %c0_31, %c0_32] : memref<4x1x128xf32, #tpu.memory_space<vmem>>, vector<1x1x128xf32>
    %32 = vector.shape_cast %31 : vector<1x1x128xf32> to vector<1x128xf32>
    %33 = vector.shape_cast %32 : vector<1x128xf32> to vector<1x1x128xf32>
    %34 = vector.broadcast %33 : vector<1x1x128xf32> to vector<2x16x128xf32>
    %35 = arith.mulf %30, %34 : vector<2x16x128xf32>
    %36 = arith.addf %29, %35 : vector<2x16x128xf32>
    %c0_33 = arith.constant 0 : index
    %c0_34 = arith.constant 0 : index
    %37 = vector.load %arg3[%c0_33, %c0_34] : memref<1x128xf32, #tpu.memory_space<vmem>>, vector<1x128xf32>
    %38 = vector.shape_cast %37 : vector<1x128xf32> to vector<1x1x128xf32>
    %39 = vector.broadcast %38 : vector<1x1x128xf32> to vector<2x16x128xf32>
    %40 = arith.addf %36, %39 : vector<2x16x128xf32>
    %cst_35 = arith.constant 0.000000e+00 : f32
    %41 = vector.broadcast %cst_35 : f32 to vector<2x16x128xf32>
    %42 = arith.maximumf %40, %41 : vector<2x16x128xf32>
    %c0_36 = arith.constant 0 : index
    %c1_37 = arith.constant 1 : index
    %c0_38 = arith.constant 0 : index
    %43 = vector.load %arg15[%c0_36, %c1_37, %c0_38] : memref<2x19x128xf32, #tpu.memory_space<vmem>>, vector<2x16x128xf32>
    tpu.vector_store %arg15[%c0_36, %c1_37, %c0_38], %42 {strides = array<i32>} : memref<2x19x128xf32, #tpu.memory_space<vmem>>, vector<2x16x128xf32>,
    %c0_39 = arith.constant 0 : index
    %c0_40 = arith.constant 0 : index
    %c0_41 = arith.constant 0 : index
    %44 = vector.load %arg15[%c0_39, %c0_40, %c0_41] : memref<2x19x128xf32, #tpu.memory_space<vmem>>, vector<2x16x128xf32>
    %c0_42 = arith.constant 0 : index
    %c0_43 = arith.constant 0 : index
    %c0_44 = arith.constant 0 : index
    %45 = vector.load %arg16[%c0_42, %c0_43, %c0_44] : memref<2x16x512xf32, #tpu.memory_space<vmem>>, vector<2x16x128xf32>
    tpu.vector_store %arg16[%c0_42, %c0_43, %c0_44], %44 {strides = array<i32>} : memref<2x16x512xf32, #tpu.memory_space<vmem>>, vector<2x16x128xf32>,
    %c0_45 = arith.constant 0 : index
    %c1_46 = arith.constant 1 : index
    %c0_47 = arith.constant 0 : index
    %46 = vector.load %arg15[%c0_45, %c1_46, %c0_47] : memref<2x19x128xf32, #tpu.memory_space<vmem>>, vector<2x16x128xf32>
    %c0_48 = arith.constant 0 : index
    %c0_49 = arith.constant 0 : index
    %c128 = arith.constant 128 : index
    %47 = vector.load %arg16[%c0_48, %c0_49, %c128] : memref<2x16x512xf32, #tpu.memory_space<vmem>>, vector<2x16x128xf32>
    tpu.vector_store %arg16[%c0_48, %c0_49, %c128], %46 {strides = array<i32>} : memref<2x16x512xf32, #tpu.memory_space<vmem>>, vector<2x16x128xf32>,
    %c0_50 = arith.constant 0 : index
    %c2_51 = arith.constant 2 : index
    %c0_52 = arith.constant 0 : index
    %48 = vector.load %arg15[%c0_50, %c2_51, %c0_52] : memref<2x19x128xf32, #tpu.memory_space<vmem>>, vector<2x16x128xf32>
    %c0_53 = arith.constant 0 : index
    %c0_54 = arith.constant 0 : index
    %c256 = arith.constant 256 : index
    %49 = vector.load %arg16[%c0_53, %c0_54, %c256] : memref<2x16x512xf32, #tpu.memory_space<vmem>>, vector<2x16x128xf32>
    tpu.vector_store %arg16[%c0_53, %c0_54, %c256], %48 {strides = array<i32>} : memref<2x16x512xf32, #tpu.memory_space<vmem>>, vector<2x16x128xf32>,
    %c0_55 = arith.constant 0 : index
    %c3_56 = arith.constant 3 : index
    %c0_57 = arith.constant 0 : index
    %50 = vector.load %arg15[%c0_55, %c3_56, %c0_57] : memref<2x19x128xf32, #tpu.memory_space<vmem>>, vector<2x16x128xf32>
    %c0_58 = arith.constant 0 : index
    %c0_59 = arith.constant 0 : index
    %c384 = arith.constant 384 : index
    %51 = vector.load %arg16[%c0_58, %c0_59, %c384] : memref<2x16x512xf32, #tpu.memory_space<vmem>>, vector<2x16x128xf32>
    tpu.vector_store %arg16[%c0_58, %c0_59, %c384], %50 {strides = array<i32>} : memref<2x16x512xf32, #tpu.memory_space<vmem>>, vector<2x16x128xf32>,
    %c0_60 = arith.constant 0 : index
    %c0_61 = arith.constant 0 : index
    %c0_62 = arith.constant 0 : index
    %52 = vector.load %arg16[%c0_60, %c0_61, %c0_62] : memref<2x16x512xf32, #tpu.memory_space<vmem>>, vector<2x16x512xf32>
    %c0_63 = arith.constant 0 : index
    %c0_64 = arith.constant 0 : index
    %53 = vector.load %arg4[%c0_63, %c0_64] : memref<512x128xf32, #tpu.memory_space<vmem>>, vector<512x128xf32>
    %cst_65 = arith.constant dense<0.000000e+00> : vector<2x16x128xf32>
    %54 = tpu.matmul %52, %53, %cst_65 {dimension_numbers = #tpu.dot_dimension_numbers<[2], [0], [0, 1], [1], [0, 0, 0, 1, 1, 1], [], []>} : vector<2x16x512xf32>, vector<512x128xf32>, vector<2x16x128xf32> -> vector<2x16x128xf32>
    %c0_66 = arith.constant 0 : index
    %c0_67 = arith.constant 0 : index
    %55 = vector.load %arg5[%c0_66, %c0_67] : memref<1x128xf32, #tpu.memory_space<vmem>>, vector<1x128xf32>
    %56 = vector.shape_cast %55 : vector<1x128xf32> to vector<1x1x128xf32>
    %57 = vector.broadcast %56 : vector<1x1x128xf32> to vector<2x16x128xf32>
    %58 = arith.addf %54, %57 : vector<2x16x128xf32>
    %cst_68 = arith.constant 0.000000e+00 : f32
    %59 = vector.broadcast %cst_68 : f32 to vector<2x16x128xf32>
    %60 = arith.maximumf %58, %59 : vector<2x16x128xf32>
    %c0_69 = arith.constant 0 : index
    %c1_70 = arith.constant 1 : index
    %c0_71 = arith.constant 0 : index
    %61 = vector.load %arg15[%c0_69, %c1_70, %c0_71] : memref<2x19x128xf32, #tpu.memory_space<vmem>>, vector<2x16x128xf32>
    tpu.vector_store %arg15[%c0_69, %c1_70, %c0_71], %60 {strides = array<i32>} : memref<2x19x128xf32, #tpu.memory_space<vmem>>, vector<2x16x128xf32>,
    %c0_72 = arith.constant 0 : index
    %c0_73 = arith.constant 0 : index
    %c0_74 = arith.constant 0 : index
    %62 = vector.load %arg15[%c0_72, %c0_73, %c0_74] : memref<2x19x128xf32, #tpu.memory_space<vmem>>, vector<2x16x128xf32>
    %c0_75 = arith.constant 0 : index
    %c0_76 = arith.constant 0 : index
    %c0_77 = arith.constant 0 : index
    %63 = vector.load %arg16[%c0_75, %c0_76, %c0_77] : memref<2x16x512xf32, #tpu.memory_space<vmem>>, vector<2x16x128xf32>
    tpu.vector_store %arg16[%c0_75, %c0_76, %c0_77], %62 {strides = array<i32>} : memref<2x16x512xf32, #tpu.memory_space<vmem>>, vector<2x16x128xf32>,
    %c0_78 = arith.constant 0 : index
    %c1_79 = arith.constant 1 : index
    %c0_80 = arith.constant 0 : index
    %64 = vector.load %arg15[%c0_78, %c1_79, %c0_80] : memref<2x19x128xf32, #tpu.memory_space<vmem>>, vector<2x16x128xf32>
    %c0_81 = arith.constant 0 : index
    %c0_82 = arith.constant 0 : index
    %c128_83 = arith.constant 128 : index
    %65 = vector.load %arg16[%c0_81, %c0_82, %c128_83] : memref<2x16x512xf32, #tpu.memory_space<vmem>>, vector<2x16x128xf32>
    tpu.vector_store %arg16[%c0_81, %c0_82, %c128_83], %64 {strides = array<i32>} : memref<2x16x512xf32, #tpu.memory_space<vmem>>, vector<2x16x128xf32>,
    %c0_84 = arith.constant 0 : index
    %c2_85 = arith.constant 2 : index
    %c0_86 = arith.constant 0 : index
    %66 = vector.load %arg15[%c0_84, %c2_85, %c0_86] : memref<2x19x128xf32, #tpu.memory_space<vmem>>, vector<2x16x128xf32>
    %c0_87 = arith.constant 0 : index
    %c0_88 = arith.constant 0 : index
    %c256_89 = arith.constant 256 : index
    %67 = vector.load %arg16[%c0_87, %c0_88, %c256_89] : memref<2x16x512xf32, #tpu.memory_space<vmem>>, vector<2x16x128xf32>
    tpu.vector_store %arg16[%c0_87, %c0_88, %c256_89], %66 {strides = array<i32>} : memref<2x16x512xf32, #tpu.memory_space<vmem>>, vector<2x16x128xf32>,
    %c0_90 = arith.constant 0 : index
    %c3_91 = arith.constant 3 : index
    %c0_92 = arith.constant 0 : index
    %68 = vector.load %arg15[%c0_90, %c3_91, %c0_92] : memref<2x19x128xf32, #tpu.memory_space<vmem>>, vector<2x16x128xf32>
    %c0_93 = arith.constant 0 : index
    %c0_94 = arith.constant 0 : index
    %c384_95 = arith.constant 384 : index
    %69 = vector.load %arg16[%c0_93, %c0_94, %c384_95] : memref<2x16x512xf32, #tpu.memory_space<vmem>>, vector<2x16x128xf32>
    tpu.vector_store %arg16[%c0_93, %c0_94, %c384_95], %68 {strides = array<i32>} : memref<2x16x512xf32, #tpu.memory_space<vmem>>, vector<2x16x128xf32>,
    %c0_96 = arith.constant 0 : index
    %c0_97 = arith.constant 0 : index
    %c0_98 = arith.constant 0 : index
    %70 = vector.load %arg16[%c0_96, %c0_97, %c0_98] : memref<2x16x512xf32, #tpu.memory_space<vmem>>, vector<2x16x512xf32>
    %c0_99 = arith.constant 0 : index
    %c0_100 = arith.constant 0 : index
    %71 = vector.load %arg6[%c0_99, %c0_100] : memref<512x128xf32, #tpu.memory_space<vmem>>, vector<512x128xf32>
    %cst_101 = arith.constant dense<0.000000e+00> : vector<2x16x128xf32>
    %72 = tpu.matmul %70, %71, %cst_101 {dimension_numbers = #tpu.dot_dimension_numbers<[2], [0], [0, 1], [1], [0, 0, 0, 1, 1, 1], [], []>} : vector<2x16x512xf32>, vector<512x128xf32>, vector<2x16x128xf32> -> vector<2x16x128xf32>
    %c0_102 = arith.constant 0 : index
    %c0_103 = arith.constant 0 : index
    %73 = vector.load %arg7[%c0_102, %c0_103] : memref<1x128xf32, #tpu.memory_space<vmem>>, vector<1x128xf32>
    %74 = vector.shape_cast %73 : vector<1x128xf32> to vector<1x1x128xf32>
    %75 = vector.broadcast %74 : vector<1x1x128xf32> to vector<2x16x128xf32>
    %76 = arith.addf %72, %75 : vector<2x16x128xf32>
    %cst_104 = arith.constant 0.000000e+00 : f32
    %77 = vector.broadcast %cst_104 : f32 to vector<2x16x128xf32>
    %78 = arith.maximumf %76, %77 : vector<2x16x128xf32>
    %c0_105 = arith.constant 0 : index
    %c1_106 = arith.constant 1 : index
    %c0_107 = arith.constant 0 : index
    %79 = vector.load %arg15[%c0_105, %c1_106, %c0_107] : memref<2x19x128xf32, #tpu.memory_space<vmem>>, vector<2x16x128xf32>
    tpu.vector_store %arg15[%c0_105, %c1_106, %c0_107], %78 {strides = array<i32>} : memref<2x19x128xf32, #tpu.memory_space<vmem>>, vector<2x16x128xf32>,
    %c0_108 = arith.constant 0 : index
    %c0_109 = arith.constant 0 : index
    %c0_110 = arith.constant 0 : index
    %80 = vector.load %arg15[%c0_108, %c0_109, %c0_110] : memref<2x19x128xf32, #tpu.memory_space<vmem>>, vector<2x16x128xf32>
    %c0_111 = arith.constant 0 : index
    %c0_112 = arith.constant 0 : index
    %c0_113 = arith.constant 0 : index
    %81 = vector.load %arg16[%c0_111, %c0_112, %c0_113] : memref<2x16x512xf32, #tpu.memory_space<vmem>>, vector<2x16x128xf32>
    tpu.vector_store %arg16[%c0_111, %c0_112, %c0_113], %80 {strides = array<i32>} : memref<2x16x512xf32, #tpu.memory_space<vmem>>, vector<2x16x128xf32>,
    %c0_114 = arith.constant 0 : index
    %c1_115 = arith.constant 1 : index
    %c0_116 = arith.constant 0 : index
    %82 = vector.load %arg15[%c0_114, %c1_115, %c0_116] : memref<2x19x128xf32, #tpu.memory_space<vmem>>, vector<2x16x128xf32>
    %c0_117 = arith.constant 0 : index
    %c0_118 = arith.constant 0 : index
    %c128_119 = arith.constant 128 : index
    %83 = vector.load %arg16[%c0_117, %c0_118, %c128_119] : memref<2x16x512xf32, #tpu.memory_space<vmem>>, vector<2x16x128xf32>
    tpu.vector_store %arg16[%c0_117, %c0_118, %c128_119], %82 {strides = array<i32>} : memref<2x16x512xf32, #tpu.memory_space<vmem>>, vector<2x16x128xf32>,
    %c0_120 = arith.constant 0 : index
    %c2_121 = arith.constant 2 : index
    %c0_122 = arith.constant 0 : index
    %84 = vector.load %arg15[%c0_120, %c2_121, %c0_122] : memref<2x19x128xf32, #tpu.memory_space<vmem>>, vector<2x16x128xf32>
    %c0_123 = arith.constant 0 : index
    %c0_124 = arith.constant 0 : index
    %c256_125 = arith.constant 256 : index
    %85 = vector.load %arg16[%c0_123, %c0_124, %c256_125] : memref<2x16x512xf32, #tpu.memory_space<vmem>>, vector<2x16x128xf32>
    tpu.vector_store %arg16[%c0_123, %c0_124, %c256_125], %84 {strides = array<i32>} : memref<2x16x512xf32, #tpu.memory_space<vmem>>, vector<2x16x128xf32>,
    %c0_126 = arith.constant 0 : index
    %c3_127 = arith.constant 3 : index
    %c0_128 = arith.constant 0 : index
    %86 = vector.load %arg15[%c0_126, %c3_127, %c0_128] : memref<2x19x128xf32, #tpu.memory_space<vmem>>, vector<2x16x128xf32>
    %c0_129 = arith.constant 0 : index
    %c0_130 = arith.constant 0 : index
    %c384_131 = arith.constant 384 : index
    %87 = vector.load %arg16[%c0_129, %c0_130, %c384_131] : memref<2x16x512xf32, #tpu.memory_space<vmem>>, vector<2x16x128xf32>
    tpu.vector_store %arg16[%c0_129, %c0_130, %c384_131], %86 {strides = array<i32>} : memref<2x16x512xf32, #tpu.memory_space<vmem>>, vector<2x16x128xf32>,
    %c0_132 = arith.constant 0 : index
    %c0_133 = arith.constant 0 : index
    %c0_134 = arith.constant 0 : index
    %88 = vector.load %arg16[%c0_132, %c0_133, %c0_134] : memref<2x16x512xf32, #tpu.memory_space<vmem>>, vector<2x16x512xf32>
    %c0_135 = arith.constant 0 : index
    %c0_136 = arith.constant 0 : index
    %89 = vector.load %arg8[%c0_135, %c0_136] : memref<512x128xf32, #tpu.memory_space<vmem>>, vector<512x128xf32>
    %cst_137 = arith.constant dense<0.000000e+00> : vector<2x16x128xf32>
    %90 = tpu.matmul %88, %89, %cst_137 {dimension_numbers = #tpu.dot_dimension_numbers<[2], [0], [0, 1], [1], [0, 0, 0, 1, 1, 1], [], []>} : vector<2x16x512xf32>, vector<512x128xf32>, vector<2x16x128xf32> -> vector<2x16x128xf32>
    %c0_138 = arith.constant 0 : index
    %c0_139 = arith.constant 0 : index
    %91 = vector.load %arg9[%c0_138, %c0_139] : memref<1x128xf32, #tpu.memory_space<vmem>>, vector<1x128xf32>
    %92 = vector.shape_cast %91 : vector<1x128xf32> to vector<1x1x128xf32>
    %93 = vector.broadcast %92 : vector<1x1x128xf32> to vector<2x16x128xf32>
    %94 = arith.addf %90, %93 : vector<2x16x128xf32>
    %cst_140 = arith.constant 0.000000e+00 : f32
    %95 = vector.broadcast %cst_140 : f32 to vector<2x16x128xf32>
    %96 = arith.maximumf %94, %95 : vector<2x16x128xf32>
    %97 = vector.extract_strided_slice %96 {offsets = [0, 0, 0], sizes = [2, 1, 128], strides = [1, 1, 1]} : vector<2x16x128xf32> to vector<2x1x128xf32>
    %98 = vector.shape_cast %97 : vector<2x1x128xf32> to vector<2x128xf32>
    %c0_141 = arith.constant 0 : index
    %c0_142 = arith.constant 0 : index
    %99 = vector.load %arg17[%c0_141, %c0_142] : memref<2x2048xf32, #tpu.memory_space<vmem>>, vector<2x128xf32>
    tpu.vector_store %arg17[%c0_141, %c0_142], %98 {strides = array<i32>} : memref<2x2048xf32, #tpu.memory_space<vmem>>, vector<2x128xf32>,
    %100 = vector.extract_strided_slice %96 {offsets = [0, 1, 0], sizes = [2, 1, 128], strides = [1, 1, 1]} : vector<2x16x128xf32> to vector<2x1x128xf32>
    %101 = vector.shape_cast %100 : vector<2x1x128xf32> to vector<2x128xf32>
    %c0_143 = arith.constant 0 : index
    %c128_144 = arith.constant 128 : index
    %102 = vector.load %arg17[%c0_143, %c128_144] : memref<2x2048xf32, #tpu.memory_space<vmem>>, vector<2x128xf32>
    tpu.vector_store %arg17[%c0_143, %c128_144], %101 {strides = array<i32>} : memref<2x2048xf32, #tpu.memory_space<vmem>>, vector<2x128xf32>,
    %103 = vector.extract_strided_slice %96 {offsets = [0, 2, 0], sizes = [2, 1, 128], strides = [1, 1, 1]} : vector<2x16x128xf32> to vector<2x1x128xf32>
    %104 = vector.shape_cast %103 : vector<2x1x128xf32> to vector<2x128xf32>
    %c0_145 = arith.constant 0 : index
    %c256_146 = arith.constant 256 : index
    %105 = vector.load %arg17[%c0_145, %c256_146] : memref<2x2048xf32, #tpu.memory_space<vmem>>, vector<2x128xf32>
    tpu.vector_store %arg17[%c0_145, %c256_146], %104 {strides = array<i32>} : memref<2x2048xf32, #tpu.memory_space<vmem>>, vector<2x128xf32>,
    %106 = vector.extract_strided_slice %96 {offsets = [0, 3, 0], sizes = [2, 1, 128], strides = [1, 1, 1]} : vector<2x16x128xf32> to vector<2x1x128xf32>
    %107 = vector.shape_cast %106 : vector<2x1x128xf32> to vector<2x128xf32>
    %c0_147 = arith.constant 0 : index
    %c384_148 = arith.constant 384 : index
    %108 = vector.load %arg17[%c0_147, %c384_148] : memref<2x2048xf32, #tpu.memory_space<vmem>>, vector<2x128xf32>
    tpu.vector_store %arg17[%c0_147, %c384_148], %107 {strides = array<i32>} : memref<2x2048xf32, #tpu.memory_space<vmem>>, vector<2x128xf32>,
    %109 = vector.extract_strided_slice %96 {offsets = [0, 4, 0], sizes = [2, 1, 128], strides = [1, 1, 1]} : vector<2x16x128xf32> to vector<2x1x128xf32>
    %110 = vector.shape_cast %109 : vector<2x1x128xf32> to vector<2x128xf32>
    %c0_149 = arith.constant 0 : index
    %c512 = arith.constant 512 : index
    %111 = vector.load %arg17[%c0_149, %c512] : memref<2x2048xf32, #tpu.memory_space<vmem>>, vector<2x128xf32>
    tpu.vector_store %arg17[%c0_149, %c512], %110 {strides = array<i32>} : memref<2x2048xf32, #tpu.memory_space<vmem>>, vector<2x128xf32>,
    %112 = vector.extract_strided_slice %96 {offsets = [0, 5, 0], sizes = [2, 1, 128], strides = [1, 1, 1]} : vector<2x16x128xf32> to vector<2x1x128xf32>
    %113 = vector.shape_cast %112 : vector<2x1x128xf32> to vector<2x128xf32>
    %c0_150 = arith.constant 0 : index
    %c640 = arith.constant 640 : index
    %114 = vector.load %arg17[%c0_150, %c640] : memref<2x2048xf32, #tpu.memory_space<vmem>>, vector<2x128xf32>
    tpu.vector_store %arg17[%c0_150, %c640], %113 {strides = array<i32>} : memref<2x2048xf32, #tpu.memory_space<vmem>>, vector<2x128xf32>,
    %115 = vector.extract_strided_slice %96 {offsets = [0, 6, 0], sizes = [2, 1, 128], strides = [1, 1, 1]} : vector<2x16x128xf32> to vector<2x1x128xf32>
    %116 = vector.shape_cast %115 : vector<2x1x128xf32> to vector<2x128xf32>
    %c0_151 = arith.constant 0 : index
    %c768 = arith.constant 768 : index
    %117 = vector.load %arg17[%c0_151, %c768] : memref<2x2048xf32, #tpu.memory_space<vmem>>, vector<2x128xf32>
    tpu.vector_store %arg17[%c0_151, %c768], %116 {strides = array<i32>} : memref<2x2048xf32, #tpu.memory_space<vmem>>, vector<2x128xf32>,
    %118 = vector.extract_strided_slice %96 {offsets = [0, 7, 0], sizes = [2, 1, 128], strides = [1, 1, 1]} : vector<2x16x128xf32> to vector<2x1x128xf32>
    %119 = vector.shape_cast %118 : vector<2x1x128xf32> to vector<2x128xf32>
    %c0_152 = arith.constant 0 : index
    %c896 = arith.constant 896 : index
    %120 = vector.load %arg17[%c0_152, %c896] : memref<2x2048xf32, #tpu.memory_space<vmem>>, vector<2x128xf32>
    tpu.vector_store %arg17[%c0_152, %c896], %119 {strides = array<i32>} : memref<2x2048xf32, #tpu.memory_space<vmem>>, vector<2x128xf32>,
    %121 = vector.extract_strided_slice %96 {offsets = [0, 8, 0], sizes = [2, 1, 128], strides = [1, 1, 1]} : vector<2x16x128xf32> to vector<2x1x128xf32>
    %122 = vector.shape_cast %121 : vector<2x1x128xf32> to vector<2x128xf32>
    %c0_153 = arith.constant 0 : index
    %c1024 = arith.constant 1024 : index
    %123 = vector.load %arg17[%c0_153, %c1024] : memref<2x2048xf32, #tpu.memory_space<vmem>>, vector<2x128xf32>
    tpu.vector_store %arg17[%c0_153, %c1024], %122 {strides = array<i32>} : memref<2x2048xf32, #tpu.memory_space<vmem>>, vector<2x128xf32>,
    %124 = vector.extract_strided_slice %96 {offsets = [0, 9, 0], sizes = [2, 1, 128], strides = [1, 1, 1]} : vector<2x16x128xf32> to vector<2x1x128xf32>
    %125 = vector.shape_cast %124 : vector<2x1x128xf32> to vector<2x128xf32>
    %c0_154 = arith.constant 0 : index
    %c1152 = arith.constant 1152 : index
    %126 = vector.load %arg17[%c0_154, %c1152] : memref<2x2048xf32, #tpu.memory_space<vmem>>, vector<2x128xf32>
    tpu.vector_store %arg17[%c0_154, %c1152], %125 {strides = array<i32>} : memref<2x2048xf32, #tpu.memory_space<vmem>>, vector<2x128xf32>,
    %127 = vector.extract_strided_slice %96 {offsets = [0, 10, 0], sizes = [2, 1, 128], strides = [1, 1, 1]} : vector<2x16x128xf32> to vector<2x1x128xf32>
    %128 = vector.shape_cast %127 : vector<2x1x128xf32> to vector<2x128xf32>
    %c0_155 = arith.constant 0 : index
    %c1280 = arith.constant 1280 : index
    %129 = vector.load %arg17[%c0_155, %c1280] : memref<2x2048xf32, #tpu.memory_space<vmem>>, vector<2x128xf32>
    tpu.vector_store %arg17[%c0_155, %c1280], %128 {strides = array<i32>} : memref<2x2048xf32, #tpu.memory_space<vmem>>, vector<2x128xf32>,
    %130 = vector.extract_strided_slice %96 {offsets = [0, 11, 0], sizes = [2, 1, 128], strides = [1, 1, 1]} : vector<2x16x128xf32> to vector<2x1x128xf32>
    %131 = vector.shape_cast %130 : vector<2x1x128xf32> to vector<2x128xf32>
    %c0_156 = arith.constant 0 : index
    %c1408 = arith.constant 1408 : index
    %132 = vector.load %arg17[%c0_156, %c1408] : memref<2x2048xf32, #tpu.memory_space<vmem>>, vector<2x128xf32>
    tpu.vector_store %arg17[%c0_156, %c1408], %131 {strides = array<i32>} : memref<2x2048xf32, #tpu.memory_space<vmem>>, vector<2x128xf32>,
    %133 = vector.extract_strided_slice %96 {offsets = [0, 12, 0], sizes = [2, 1, 128], strides = [1, 1, 1]} : vector<2x16x128xf32> to vector<2x1x128xf32>
    %134 = vector.shape_cast %133 : vector<2x1x128xf32> to vector<2x128xf32>
    %c0_157 = arith.constant 0 : index
    %c1536 = arith.constant 1536 : index
    %135 = vector.load %arg17[%c0_157, %c1536] : memref<2x2048xf32, #tpu.memory_space<vmem>>, vector<2x128xf32>
    tpu.vector_store %arg17[%c0_157, %c1536], %134 {strides = array<i32>} : memref<2x2048xf32, #tpu.memory_space<vmem>>, vector<2x128xf32>,
    %136 = vector.extract_strided_slice %96 {offsets = [0, 13, 0], sizes = [2, 1, 128], strides = [1, 1, 1]} : vector<2x16x128xf32> to vector<2x1x128xf32>
    %137 = vector.shape_cast %136 : vector<2x1x128xf32> to vector<2x128xf32>
    %c0_158 = arith.constant 0 : index
    %c1664 = arith.constant 1664 : index
    %138 = vector.load %arg17[%c0_158, %c1664] : memref<2x2048xf32, #tpu.memory_space<vmem>>, vector<2x128xf32>
    tpu.vector_store %arg17[%c0_158, %c1664], %137 {strides = array<i32>} : memref<2x2048xf32, #tpu.memory_space<vmem>>, vector<2x128xf32>,
    %139 = vector.extract_strided_slice %96 {offsets = [0, 14, 0], sizes = [2, 1, 128], strides = [1, 1, 1]} : vector<2x16x128xf32> to vector<2x1x128xf32>
    %140 = vector.shape_cast %139 : vector<2x1x128xf32> to vector<2x128xf32>
    %c0_159 = arith.constant 0 : index
    %c1792 = arith.constant 1792 : index
    %141 = vector.load %arg17[%c0_159, %c1792] : memref<2x2048xf32, #tpu.memory_space<vmem>>, vector<2x128xf32>
    tpu.vector_store %arg17[%c0_159, %c1792], %140 {strides = array<i32>} : memref<2x2048xf32, #tpu.memory_space<vmem>>, vector<2x128xf32>,
    %142 = vector.extract_strided_slice %96 {offsets = [0, 15, 0], sizes = [2, 1, 128], strides = [1, 1, 1]} : vector<2x16x128xf32> to vector<2x1x128xf32>
    %143 = vector.shape_cast %142 : vector<2x1x128xf32> to vector<2x128xf32>
    %c0_160 = arith.constant 0 : index
    %c1920 = arith.constant 1920 : index
    %144 = vector.load %arg17[%c0_160, %c1920] : memref<2x2048xf32, #tpu.memory_space<vmem>>, vector<2x128xf32>
    tpu.vector_store %arg17[%c0_160, %c1920], %143 {strides = array<i32>} : memref<2x2048xf32, #tpu.memory_space<vmem>>, vector<2x128xf32>,
    %c0_161 = arith.constant 0 : index
    %c0_162 = arith.constant 0 : index
    %145 = vector.load %arg17[%c0_161, %c0_162] : memref<2x2048xf32, #tpu.memory_space<vmem>>, vector<2x2048xf32>
    %c0_163 = arith.constant 0 : index
    %c0_164 = arith.constant 0 : index
    %146 = vector.load %arg10[%c0_163, %c0_164] : memref<2048x64xf32, #tpu.memory_space<vmem>>, vector<2048x64xf32>
    %cst_165 = arith.constant dense<0.000000e+00> : vector<2x64xf32>
    %147 = tpu.matmul %145, %146, %cst_165 {dimension_numbers = #tpu.dot_dimension_numbers<[1], [0], [0], [1], [0, 0, 1, 1], [], []>} : vector<2x2048xf32>, vector<2048x64xf32>, vector<2x64xf32> -> vector<2x64xf32>
    %c0_166 = arith.constant 0 : index
    %c0_167 = arith.constant 0 : index
    %148 = vector.load %arg11[%c0_166, %c0_167] : memref<1x64xf32, #tpu.memory_space<vmem>>, vector<1x64xf32>
    %149 = vector.broadcast %148 : vector<1x64xf32> to vector<2x64xf32>
    %150 = arith.addf %147, %149 : vector<2x64xf32>
    %cst_168 = arith.constant 0.000000e+00 : f32
    %151 = vector.broadcast %cst_168 : f32 to vector<2x64xf32>
    %152 = arith.maximumf %150, %151 : vector<2x64xf32>
    %c0_169 = arith.constant 0 : index
    %c0_170 = arith.constant 0 : index
    %153 = vector.load %arg12[%c0_169, %c0_170] : memref<1x64xf32, #tpu.memory_space<vmem>>, vector<1x64xf32>
    %154 = vector.broadcast %153 : vector<1x64xf32> to vector<2x64xf32>
    %155 = arith.mulf %152, %154 : vector<2x64xf32>
    %cst_171 = arith.constant dense<0.000000e+00> : vector<2xf32>
    %156 = vector.multi_reduction <add>, %155, %cst_171 [1] : vector<2x64xf32> to vector<2xf32>
    %157 = vector.shape_cast %156 : vector<2xf32> to vector<2x1xf32>
    %c0_172 = arith.constant 0 : index
    %c0_173 = arith.constant 0 : index
    %158 = vector.load %arg13[%c0_172, %c0_173] : memref<1x1xf32, #tpu.memory_space<vmem>>, vector<1x1xf32>
    %159 = vector.broadcast %158 : vector<1x1xf32> to vector<2x1xf32>
    %160 = arith.addf %157, %159 : vector<2x1xf32>
    %c0_174 = arith.constant 0 : index
    %c0_175 = arith.constant 0 : index
    %161 = vector.load %arg14[%c0_174, %c0_175] : memref<2x1xf32, #tpu.memory_space<vmem>>, vector<2x1xf32>
    tpu.vector_store %arg14[%c0_174, %c0_175], %160 {strides = array<i32>} : memref<2x1xf32, #tpu.memory_space<vmem>>, vector<2x1xf32>,
    return
  }
  func.func @transform_0(%arg0: i32) -> (i32, i32, i32) {
    %c0_i32 = arith.constant 0 : i32
    %c0_i32_0 = arith.constant 0 : i32
    %c0_i32_1 = arith.constant 0 : i32
    return %arg0, %c0_i32, %c0_i32_0 : i32, i32, i32
  }
  func.func @transform_1(%arg0: i32) -> (i32, i32, i32) {
    %c0_i32 = arith.constant 0 : i32
    %c0_i32_0 = arith.constant 0 : i32
    %c0_i32_1 = arith.constant 0 : i32
    %c0_i32_2 = arith.constant 0 : i32
    return %c0_i32, %c0_i32_0, %c0_i32_1 : i32, i32, i32
  }
  func.func @transform_2(%arg0: i32) -> (i32, i32) {
    %c0_i32 = arith.constant 0 : i32
    %c0_i32_0 = arith.constant 0 : i32
    %c0_i32_1 = arith.constant 0 : i32
    return %c0_i32, %c0_i32_0 : i32, i32
  }
  func.func @transform_3(%arg0: i32) -> (i32, i32) {
    %c0_i32 = arith.constant 0 : i32
    %c0_i32_0 = arith.constant 0 : i32
    %c0_i32_1 = arith.constant 0 : i32
    return %c0_i32, %c0_i32_0 : i32, i32
  }
  func.func @transform_4(%arg0: i32) -> (i32, i32) {
    %c0_i32 = arith.constant 0 : i32
    %c0_i32_0 = arith.constant 0 : i32
    %c0_i32_1 = arith.constant 0 : i32
    return %c0_i32, %c0_i32_0 : i32, i32
  }
  func.func @transform_5(%arg0: i32) -> (i32, i32) {
    %c0_i32 = arith.constant 0 : i32
    %c0_i32_0 = arith.constant 0 : i32
    %c0_i32_1 = arith.constant 0 : i32
    return %c0_i32, %c0_i32_0 : i32, i32
  }
  func.func @transform_6(%arg0: i32) -> (i32, i32) {
    %c0_i32 = arith.constant 0 : i32
    %c0_i32_0 = arith.constant 0 : i32
    %c0_i32_1 = arith.constant 0 : i32
    return %c0_i32, %c0_i32_0 : i32, i32
  }
  func.func @transform_7(%arg0: i32) -> (i32, i32) {
    %c0_i32 = arith.constant 0 : i32
    %c0_i32_0 = arith.constant 0 : i32
    %c0_i32_1 = arith.constant 0 : i32
    return %c0_i32, %c0_i32_0 : i32, i32
  }
  func.func @transform_8(%arg0: i32) -> (i32, i32) {
    %c0_i32 = arith.constant 0 : i32
    %c0_i32_0 = arith.constant 0 : i32
    %c0_i32_1 = arith.constant 0 : i32
    return %c0_i32, %c0_i32_0 : i32, i32
  }
  func.func @transform_9(%arg0: i32) -> (i32, i32) {
    %c0_i32 = arith.constant 0 : i32
    %c0_i32_0 = arith.constant 0 : i32
    %c0_i32_1 = arith.constant 0 : i32
    return %c0_i32, %c0_i32_0 : i32, i32
  }
  func.func @transform_10(%arg0: i32) -> (i32, i32) {
    %c0_i32 = arith.constant 0 : i32
    %c0_i32_0 = arith.constant 0 : i32
    %c0_i32_1 = arith.constant 0 : i32
    return %c0_i32, %c0_i32_0 : i32, i32
  }
  func.func @transform_11(%arg0: i32) -> (i32, i32) {
    %c0_i32 = arith.constant 0 : i32
    %c0_i32_0 = arith.constant 0 : i32
    %c0_i32_1 = arith.constant 0 : i32
    return %c0_i32, %c0_i32_0 : i32, i32
  }
  func.func @transform_12(%arg0: i32) -> (i32, i32) {
    %c0_i32 = arith.constant 0 : i32
    %c0_i32_0 = arith.constant 0 : i32
    %c0_i32_1 = arith.constant 0 : i32
    return %c0_i32, %c0_i32_0 : i32, i32
  }
  func.func @transform_13(%arg0: i32) -> (i32, i32) {
    %c0_i32 = arith.constant 0 : i32
    %c0_i32_0 = arith.constant 0 : i32
    return %arg0, %c0_i32 : i32, i32
  }
}

</mosaic_0001>

<llo_original>
// kernel: _lambda_.1
$region0: #{_lambda_.1}
  #allocation0 [shape = 'u32[]', space=smem, size = 0x4, offset = 0x4, fixed_abs, tag = 'smem constant byte address 0x4 - core index']
  #allocation1 [shape = 'u32[72,128]{1,0:T(1,128)}', space=vmem, size = 0x9000, scoped, tag = 'internal scratch']
  #allocation2 [shape = 'f32[2,19,128]{2,1,0:T(8,128)}', space=vmem, size = 0x6000, scoped, tag = 'scratch operand']
  #allocation3 [shape = 'f32[2,16,512]{2,1,0:T(8,128)}', space=vmem, size = 0x10000, scoped, tag = 'scratch operand']
  #allocation4 [shape = 'f32[2,2048]{1,0:T(2,128)}', space=vmem, size = 0x4000, scoped, tag = 'scratch operand']
  #allocation5 [shape = 'f32[1,1]{1,0:T(1,128)S(1)}', space=vmem, size = 0x200, scoped, tag = 'scoped memory for _lambda_.1']
  %s0 = inlined_call_operand.vmem [shape: f32[2,16,1], index: 0, kind: input, shape index: {}]
  %s1 = inlined_call_operand.vmem [shape: f32[4,1,128], index: 1, kind: input, shape index: {}]
  %s2 = inlined_call_operand.vmem [shape: f32[1,128], index: 2, kind: input, shape index: {}]
  %s3 = inlined_call_operand.hbm [shape: f32[512,128], index: 3, kind: input, shape index: {}]
  %s4 = inlined_call_operand.vmem [shape: f32[1,128], index: 4, kind: input, shape index: {}]
  %s5 = inlined_call_operand.hbm [shape: f32[512,128], index: 5, kind: input, shape index: {}]
  %s6 = inlined_call_operand.vmem [shape: f32[1,128], index: 6, kind: input, shape index: {}]
  %s7 = inlined_call_operand.hbm [shape: f32[512,128], index: 7, kind: input, shape index: {}]
  %s8 = inlined_call_operand.vmem [shape: f32[1,128], index: 8, kind: input, shape index: {}]
  %s9 = inlined_call_operand.hbm [shape: f32[2048,64], index: 9, kind: input, shape index: {}]
  %s10 = inlined_call_operand.vmem [shape: f32[1,64], index: 10, kind: input, shape index: {}]
  %s11 = inlined_call_operand.vmem [shape: f32[1,64], index: 11, kind: input, shape index: {}]
  %s12 = inlined_call_operand.<no memory space> [shape: f32[1,1], index: 12, kind: input, shape index: {}]
  %s13 = inlined_call_operand.vmem [shape: f32[2,1], index: 13, kind: output, shape index: {}]
  %s14 = sld [smem:[#allocation0]]
  $region78: #{_lambda_.1} parent=0
    _
  %s16 = ssub.s32 1, %s14
  %s17 = scalar_select 0, %s16, %s14
  %v18 = vstv %s12
  %19 = vst [vmem:[#allocation5] sm:$0x1] %v18
  $region1: #{_lambda_.1} parent=0
    #allocation6 [shape = 'u8[262144]{0}', space=vmem, size = 0x40000, scoped, tag = 'input window, operand 3, single buffered']
    #allocation7 [shape = 's32[1]{0}', space=sflag, size = 0x4, scoped, tag = 'scoped memory for _lambda_.1']
    #allocation8 [shape = 'u8[262144]{0}', space=vmem, size = 0x40000, scoped, tag = 'input window, operand 5, single buffered']
    #allocation9 [shape = 's32[1]{0}', space=sflag, size = 0x4, scoped, tag = 'scoped memory for _lambda_.1']
    #allocation10 [shape = 'u8[262144]{0}', space=vmem, size = 0x40000, scoped, tag = 'input window, operand 7, single buffered']
    #allocation11 [shape = 'u8[1048576]{0}', space=vmem, size = 0x100000, scoped, tag = 'input window, operand 9, single buffered']
    #allocation12 [shape = 's32[1]{0}', space=sflag, size = 0x4, scoped, tag = 'scoped memory for _lambda_.1']
    %20 = vsyncpa [#allocation7], 0
    %21 = vsyncpa [#allocation9], 0
    %22 = vsyncpa [#allocation12], 0
    // Predicated region
    $region2: #{_lambda_.1} parent=1 // pred_check
      _
    $region3: #{_lambda_.1} parent=1 // pred_check_branch
      %24 = sbr.rel (0) target = $region5
    $region4: #{_lambda_.1} parent=1 // pred_region
      _
    $region5: #{_lambda_.1} parent=1 // pred_fallthru
      _
    // Predicated region
    $region6: #{_lambda_.1} parent=1 // pred_check
      _
    $region7: #{_lambda_.1} parent=1 // pred_check_branch
      %26 = sbr.rel (0) target = $region9
    $region8: #{_lambda_.1} parent=1 // pred_region
      _
    $region9: #{_lambda_.1} parent=1 // pred_fallthru
      _
    // Predicated region
    $region10: #{_lambda_.1} parent=1 // pred_check
      _
    $region11: #{_lambda_.1} parent=1 // pred_check_branch
      %28 = sbr.rel (0) target = $region13
    $region12: #{_lambda_.1} parent=1 // pred_region
      _
    $region13: #{_lambda_.1} parent=1 // pred_fallthru
      _
    // Predicated region
    $region14: #{_lambda_.1} parent=1 // pred_check
      _
    $region15: #{_lambda_.1} parent=1 // pred_check_branch
      %30 = sbr.rel (0) target = $region17
    $region16: #{_lambda_.1} parent=1 // pred_region
      %32 = vsyncadd [#allocation7], 0
      %s33 = sshll.u32 %s3, 4
      %s34 = int_to_ptr.hbm [resolvable:$true] %s33
      %s35 = sshll.u32 [#allocation6], 4
      %s36 = int_to_ptr.vmem [resolvable:$true] %s35
      %41 = dma.hbm_to_vmem [thread:$0]  %s34, 8192, %s36, [#allocation7], 128, 128, 8
    $region17: #{_lambda_.1} parent=1 // pred_fallthru
      _
    // Predicated region
    $region18: #{_lambda_.1} parent=1 // pred_check
      _
    $region19: #{_lambda_.1} parent=1 // pred_check_branch
      %43 = sbr.rel (0) target = $region21
    $region20: #{_lambda_.1} parent=1 // pred_region
      _
    $region21: #{_lambda_.1} parent=1 // pred_fallthru
      _
    // Predicated region
    $region22: #{_lambda_.1} parent=1 // pred_check
      _
    $region23: #{_lambda_.1} parent=1 // pred_check_branch
      %45 = sbr.rel (0) target = $region25
    $region24: #{_lambda_.1} parent=1 // pred_region
      %47 = vsyncadd [#allocation9], 0
      %s48 = sshll.u32 %s5, 4
      %s49 = int_to_ptr.hbm [resolvable:$true] %s48
      %s50 = sshll.u32 [#allocation8], 4
      %s51 = int_to_ptr.vmem [resolvable:$true] %s50
      %56 = dma.hbm_to_vmem [thread:$0]  %s49, 8192, %s51, [#allocation9], 128, 128, 8
    $region25: #{_lambda_.1} parent=1 // pred_fallthru
      _
    // Predicated region
    $region26: #{_lambda_.1} parent=1 // pred_check
      _
    $region27: #{_lambda_.1} parent=1 // pred_check_branch
      %58 = sbr.rel (0) target = $region29
    $region28: #{_lambda_.1} parent=1 // pred_region
      _
    $region29: #{_lambda_.1} parent=1 // pred_fallthru
      _
    // Predicated region
    $region30: #{_lambda_.1} parent=1 // pred_check
      _
    $region31: #{_lambda_.1} parent=1 // pred_check_branch
      %60 = sbr.rel (0) target = $region33
    $region32: #{_lambda_.1} parent=1 // pred_region
      %62 = vsyncadd [#allocation9], 0
      %s63 = sshll.u32 %s7, 4
      %s64 = int_to_ptr.hbm [resolvable:$true] %s63
      %s65 = sshll.u32 [#allocation10], 4
      %s66 = int_to_ptr.vmem [resolvable:$true] %s65
      %71 = dma.hbm_to_vmem [thread:$0]  %s64, 8192, %s66, [#allocation9], 128, 128, 8
    $region33: #{_lambda_.1} parent=1 // pred_fallthru
      _
    // Predicated region
    $region34: #{_lambda_.1} parent=1 // pred_check
      _
    $region35: #{_lambda_.1} parent=1 // pred_check_branch
      %73 = sbr.rel (0) target = $region37
    $region36: #{_lambda_.1} parent=1 // pred_region
      _
    $region37: #{_lambda_.1} parent=1 // pred_fallthru
      _
    // Predicated region
    $region38: #{_lambda_.1} parent=1 // pred_check
      _
    $region39: #{_lambda_.1} parent=1 // pred_check_branch
      %75 = sbr.rel (0) target = $region41
    $region40: #{_lambda_.1} parent=1 // pred_region
      %77 = vsyncadd [#allocation12], 0
      %s78 = sshll.u32 %s9, 4
      %s79 = int_to_ptr.hbm [resolvable:$true] %s78
      %s80 = sshll.u32 [#allocation11], 4
      %s81 = int_to_ptr.vmem [resolvable:$true] %s80
      %86 = dma.hbm_to_vmem [thread:$0]  %s79, 32768, %s81, [#allocation12], 128, 128, 8
    $region41: #{_lambda_.1} parent=1 // pred_fallthru
      _
    // Predicated region
    $region42: #{_lambda_.1} parent=1 // pred_check
      _
    $region43: #{_lambda_.1} parent=1 // pred_check_branch
      %88 = sbr.rel (0) target = $region45
    $region44: #{_lambda_.1} parent=1 // pred_region
      _
    $region45: #{_lambda_.1} parent=1 // pred_fallthru
      _
    // Predicated region
    $region46: #{_lambda_.1} parent=1 // pred_check
      _
    $region47: #{_lambda_.1} parent=1 // pred_check_branch
      %90 = sbr.rel (0) target = $region49
    $region48: #{_lambda_.1} parent=1 // pred_region
      _
    $region49: #{_lambda_.1} parent=1 // pred_fallthru
      _
    // Predicated region
    $region50: #{_lambda_.1} parent=1 // pred_check
      _
    $region51: #{_lambda_.1} parent=1 // pred_check_branch
      %92 = sbr.rel (0) target = $region53
    $region52: #{_lambda_.1} parent=1 // pred_region
      _
    $region53: #{_lambda_.1} parent=1 // pred_fallthru
      _
    // Predicated region
    $region54: #{_lambda_.1} parent=1 // pred_check
      _
    $region55: #{_lambda_.1} parent=1 // pred_check_branch
      %94 = sbr.rel (0) target = $region57
    $region56: #{_lambda_.1} parent=1 // pred_region
      %96 = dma.done [#allocation7], 8192
    $region57: #{_lambda_.1} parent=1 // pred_fallthru
      _
    // Predicated region
    $region58: #{_lambda_.1} parent=1 // pred_check
      _
    $region59: #{_lambda_.1} parent=1 // pred_check_branch
      %98 = sbr.rel (0) target = $region61
    $region60: #{_lambda_.1} parent=1 // pred_region
      %100 = dma.done [#allocation9], 8192
    $region61: #{_lambda_.1} parent=1 // pred_fallthru
      _
    // Predicated region
    $region62: #{_lambda_.1} parent=1 // pred_check
      _
    $region63: #{_lambda_.1} parent=1 // pred_check_branch
      %102 = sbr.rel (0) target = $region65
    $region64: #{_lambda_.1} parent=1 // pred_region
      %104 = dma.done [#allocation9], 8192
    $region65: #{_lambda_.1} parent=1 // pred_fallthru
      _
    // Predicated region
    $region66: #{_lambda_.1} parent=1 // pred_check
      _
    $region67: #{_lambda_.1} parent=1 // pred_check_branch
      %106 = sbr.rel (0) target = $region69
    $region68: #{_lambda_.1} parent=1 // pred_region
      %108 = dma.done [#allocation12], 32768
    $region69: #{_lambda_.1} parent=1 // pred_fallthru
      _
    %109 = vst [vmem:[#allocation2] sm:$0x1] 0.0
    %110 = vst [vmem:[#allocation2 + $0x18] sm:$0x1] 0.0
    %111 = vst [vmem:[#allocation2 + $0x11] sm:$0x3] 0.0
    %112 = vst [vmem:[#allocation2 + $0x29] sm:$0x3] 0.0
    %v113 = vld [vmem:[%s0] sm:$0xff]
    %v114 = vld [vmem:[%s0 + $0x8] sm:$0xff]
    %v115 = vld [vmem:[%s0 + $0x10] sm:$0xff]
    %v116 = vld [vmem:[%s0 + $0x18] sm:$0xff]
    %118 = vset.pattern.permute.xlu0 0
    %119 = vperm.xlu0 %118, %v113
    %v120 = vpop.permute.xlu0 %119
    %123 = vset.pattern.permute.xlu0 0
    %124 = vperm.xlu0 %123, %v114
    %v125 = vpop.permute.xlu0 %124
    %128 = vset.pattern.permute.xlu0 0
    %129 = vperm.xlu0 %128, %v115
    %v130 = vpop.permute.xlu0 %129
    %133 = vset.pattern.permute.xlu0 0
    %134 = vperm.xlu0 %133, %v116
    %v135 = vpop.permute.xlu0 %134
    %137 = vst [vmem:[#allocation2 + $0x1] sm:$0xff] %v120
    %138 = vst [vmem:[#allocation2 + $0x9] sm:$0xff] %v125
    %139 = vst [vmem:[#allocation2 + $0x19] sm:$0xff] %v130
    %140 = vst [vmem:[#allocation2 + $0x21] sm:$0xff] %v135
    %v141 = vld [vmem:[#allocation2] sm:$0xff]
    %v142 = vld [vmem:[#allocation2 + $0x8] sm:$0xff]
    %v143 = vld [vmem:[#allocation2 + $0x18] sm:$0xff]
    %v144 = vld [vmem:[#allocation2 + $0x20] sm:$0xff]
    %v145 = vld [vmem:[%s1] sm:$0x1]
    %v147 = vperm.slane %v145, 0
    %v149 = vmul.f32 %v141, %v147
    %v150 = vmul.f32 %v142, %v147
    %v151 = vmul.f32 %v143, %v147
    %v152 = vmul.f32 %v144, %v147
    %v153 = vld [vmem:[#allocation2 + $0x1] sm:$0xff]
    %v154 = vld [vmem:[#allocation2 + $0x9] sm:$0xff]
    %v155 = vld [vmem:[#allocation2 + $0x19] sm:$0xff]
    %v156 = vld [vmem:[#allocation2 + $0x21] sm:$0xff]
    %s157 = scalar_lea.vmem %s1, 1
    %v158 = vld [vmem:[%s157] sm:$0x1]
    %v160 = vperm.slane %v158, 0
    %v162 = vmul.f32 %v153, %v160
    %v163 = vmul.f32 %v154, %v160
    %v164 = vmul.f32 %v155, %v160
    %v165 = vmul.f32 %v156, %v160
    %v166 = vadd.f32 %v149, %v162
    %v167 = vadd.f32 %v150, %v163
    %v168 = vadd.f32 %v151, %v164
    %v169 = vadd.f32 %v152, %v165
    %v170 = vld [vmem:[#allocation2 + $0x2] sm:$0xff]
    %v171 = vld [vmem:[#allocation2 + $0xa] sm:$0xff]
    %v172 = vld [vmem:[#allocation2 + $0x1a] sm:$0xff]
    %v173 = vld [vmem:[#allocation2 + $0x22] sm:$0xff]
    %s174 = scalar_lea.vmem %s1, 2
    %v175 = vld [vmem:[%s174] sm:$0x1]
    %v177 = vperm.slane %v175, 0
    %v179 = vmul.f32 %v170, %v177
    %v180 = vmul.f32 %v171, %v177
    %v181 = vmul.f32 %v172, %v177
    %v182 = vmul.f32 %v173, %v177
    %v183 = vadd.f32 %v166, %v179
    %v184 = vadd.f32 %v167, %v180
    %v185 = vadd.f32 %v168, %v181
    %v186 = vadd.f32 %v169, %v182
    %v187 = vld [vmem:[#allocation2 + $0x3] sm:$0xff]
    %v188 = vld [vmem:[#allocation2 + $0xb] sm:$0xff]
    %v189 = vld [vmem:[#allocation2 + $0x1b] sm:$0xff]
    %v190 = vld [vmem:[#allocation2 + $0x23] sm:$0xff]
    %s191 = scalar_lea.vmem %s1, 3
    %v192 = vld [vmem:[%s191] sm:$0x1]
    %v194 = vperm.slane %v192, 0
    %v196 = vmul.f32 %v187, %v194
    %v197 = vmul.f32 %v188, %v194
    %v198 = vmul.f32 %v189, %v194
    %v199 = vmul.f32 %v190, %v194
    %v200 = vadd.f32 %v183, %v196
    %v201 = vadd.f32 %v184, %v197
    %v202 = vadd.f32 %v185, %v198
    %v203 = vadd.f32 %v186, %v199
    %v204 = vld [vmem:[%s2] sm:$0x1]
    %v206 = vperm.slane %v204, 0
    %v208 = vadd.f32 %v200, %v206
    %v209 = vadd.f32 %v201, %v206
    %v210 = vadd.f32 %v202, %v206
    %v211 = vadd.f32 %v203, %v206
    %v212 = vmax.f32 %v208, 0.0
    %v213 = vmax.f32 %v209, 0.0
    %v214 = vmax.f32 %v210, 0.0
    %v215 = vmax.f32 %v211, 0.0
    %216 = vst [vmem:[#allocation2 + $0x1] sm:$0xff] %v212
    %217 = vst [vmem:[#allocation2 + $0x9] sm:$0xff] %v213
    %218 = vst [vmem:[#allocation2 + $0x19] sm:$0xff] %v214
    %219 = vst [vmem:[#allocation2 + $0x21] sm:$0xff] %v215
    %v220 = vld [vmem:[#allocation2] sm:$0xff]
    %v221 = vld [vmem:[#allocation2 + $0x8] sm:$0xff]
    %v222 = vld [vmem:[#allocation2 + $0x18] sm:$0xff]
    %v223 = vld [vmem:[#allocation2 + $0x20] sm:$0xff]
    %224 = vst [vmem:[#allocation3] sm:$0xff] %v220
    %225 = vst [vmem:[#allocation3 + $0x20] sm:$0xff] %v221
    %226 = vst [vmem:[#allocation3 + $0x40] sm:$0xff] %v222
    %227 = vst [vmem:[#allocation3 + $0x60] sm:$0xff] %v223
    %v228 = vld [vmem:[#allocation2 + $0x1] sm:$0xff]
    %v229 = vld [vmem:[#allocation2 + $0x9] sm:$0xff]
    %v230 = vld [vmem:[#allocation2 + $0x19] sm:$0xff]
    %v231 = vld [vmem:[#allocation2 + $0x21] sm:$0xff]
    %232 = vst [vmem:[#allocation3 + $0x8] sm:$0xff] %v228
    %233 = vst [vmem:[#allocation3 + $0x28] sm:$0xff] %v229
    %234 = vst [vmem:[#allocation3 + $0x48] sm:$0xff] %v230
    %235 = vst [vmem:[#allocation3 + $0x68] sm:$0xff] %v231
    %v236 = vld [vmem:[#allocation2 + $0x2] sm:$0xff]
    %v237 = vld [vmem:[#allocation2 + $0xa] sm:$0xff]
    %v238 = vld [vmem:[#allocation2 + $0x1a] sm:$0xff]
    %v239 = vld [vmem:[#allocation2 + $0x22] sm:$0xff]
    %240 = vst [vmem:[#allocation3 + $0x10] sm:$0xff] %v236
    %241 = vst [vmem:[#allocation3 + $0x30] sm:$0xff] %v237
    %242 = vst [vmem:[#allocation3 + $0x50] sm:$0xff] %v238
    %243 = vst [vmem:[#allocation3 + $0x70] sm:$0xff] %v239
    %v244 = vld [vmem:[#allocation2 + $0x3] sm:$0xff]
    %v245 = vld [vmem:[#allocation2 + $0xb] sm:$0xff]
    %v246 = vld [vmem:[#allocation2 + $0x1b] sm:$0xff]
    %v247 = vld [vmem:[#allocation2 + $0x23] sm:$0xff]
    %248 = vst [vmem:[#allocation3 + $0x18] sm:$0xff] %v244
    %249 = vst [vmem:[#allocation3 + $0x38] sm:$0xff] %v245
    %250 = vst [vmem:[#allocation3 + $0x58] sm:$0xff] %v246
    %251 = vst [vmem:[#allocation3 + $0x78] sm:$0xff] %v247
    %v252 = vld [vmem:[#allocation3] sm:$0xff]
    %v253 = vld [vmem:[#allocation3 + $0x8] sm:$0xff]
    %v254 = vld [vmem:[#allocation3 + $0x10] sm:$0xff]
    %v255 = vld [vmem:[#allocation3 + $0x18] sm:$0xff]
    %v256 = vld [vmem:[#allocation3 + $0x20] sm:$0xff]
    %v257 = vld [vmem:[#allocation3 + $0x28] sm:$0xff]
    %v258 = vld [vmem:[#allocation3 + $0x30] sm:$0xff]
    %v259 = vld [vmem:[#allocation3 + $0x38] sm:$0xff]
    %v260 = vld [vmem:[#allocation3 + $0x40] sm:$0xff]
    %v261 = vld [vmem:[#allocation3 + $0x48] sm:$0xff]
    %v262 = vld [vmem:[#allocation3 + $0x50] sm:$0xff]
    %v263 = vld [vmem:[#allocation3 + $0x58] sm:$0xff]
    %v264 = vld [vmem:[#allocation3 + $0x60] sm:$0xff]
    %v265 = vld [vmem:[#allocation3 + $0x68] sm:$0xff]
    %v266 = vld [vmem:[#allocation3 + $0x70] sm:$0xff]
    %v267 = vld [vmem:[#allocation3 + $0x78] sm:$0xff]
    %v268 = vld [vmem:[#allocation6] sm:$0xff]
    %v269 = vld [vmem:[#allocation6 + $0x8] sm:$0xff]
    %v270 = vld [vmem:[#allocation6 + $0x10] sm:$0xff]
    %v271 = vld [vmem:[#allocation6 + $0x18] sm:$0xff]
    %v272 = vld [vmem:[#allocation6 + $0x20] sm:$0xff]
    %v273 = vld [vmem:[#allocation6 + $0x28] sm:$0xff]
    %v274 = vld [vmem:[#allocation6 + $0x30] sm:$0xff]
    %v275 = vld [vmem:[#allocation6 + $0x38] sm:$0xff]
    %v276 = vld [vmem:[#allocation6 + $0x40] sm:$0xff]
    %v277 = vld [vmem:[#allocation6 + $0x48] sm:$0xff]
    %v278 = vld [vmem:[#allocation6 + $0x50] sm:$0xff]
    %v279 = vld [vmem:[#allocation6 + $0x58] sm:$0xff]
    %v280 = vld [vmem:[#allocation6 + $0x60] sm:$0xff]
    %v281 = vld [vmem:[#allocation6 + $0x68] sm:$0xff]
    %v282 = vld [vmem:[#allocation6 + $0x70] sm:$0xff]
    %v283 = vld [vmem:[#allocation6 + $0x78] sm:$0xff]
    %v284 = vld [vmem:[#allocation6 + $0x80] sm:$0xff]
    %v285 = vld [vmem:[#allocation6 + $0x88] sm:$0xff]
    %v286 = vld [vmem:[#allocation6 + $0x90] sm:$0xff]
    %v287 = vld [vmem:[#allocation6 + $0x98] sm:$0xff]
    %v288 = vld [vmem:[#allocation6 + $0xa0] sm:$0xff]
    %v289 = vld [vmem:[#allocation6 + $0xa8] sm:$0xff]
    %v290 = vld [vmem:[#allocation6 + $0xb0] sm:$0xff]
    %v291 = vld [vmem:[#allocation6 + $0xb8] sm:$0xff]
    %v292 = vld [vmem:[#allocation6 + $0xc0] sm:$0xff]
    %v293 = vld [vmem:[#allocation6 + $0xc8] sm:$0xff]
    %v294 = vld [vmem:[#allocation6 + $0xd0] sm:$0xff]
    %v295 = vld [vmem:[#allocation6 + $0xd8] sm:$0xff]
    %v296 = vld [vmem:[#allocation6 + $0xe0] sm:$0xff]
    %v297 = vld [vmem:[#allocation6 + $0xe8] sm:$0xff]
    %v298 = vld [vmem:[#allocation6 + $0xf0] sm:$0xff]
    %v299 = vld [vmem:[#allocation6 + $0xf8] sm:$0xff]
    %v300 = vld [vmem:[#allocation6 + $0x100] sm:$0xff]
    %v301 = vld [vmem:[#allocation6 + $0x108] sm:$0xff]
    %v302 = vld [vmem:[#allocation6 + $0x110] sm:$0xff]
    %v303 = vld [vmem:[#allocation6 + $0x118] sm:$0xff]
    %v304 = vld [vmem:[#allocation6 + $0x120] sm:$0xff]
    %v305 = vld [vmem:[#allocation6 + $0x128] sm:$0xff]
    %v306 = vld [vmem:[#allocation6 + $0x130] sm:$0xff]
    %v307 = vld [vmem:[#allocation6 + $0x138] sm:$0xff]
    %v308 = vld [vmem:[#allocation6 + $0x140] sm:$0xff]
    %v309 = vld [vmem:[#allocation6 + $0x148] sm:$0xff]
    %v310 = vld [vmem:[#allocation6 + $0x150] sm:$0xff]
    %v311 = vld [vmem:[#allocation6 + $0x158] sm:$0xff]
    %v312 = vld [vmem:[#allocation6 + $0x160] sm:$0xff]
    %v313 = vld [vmem:[#allocation6 + $0x168] sm:$0xff]
    %v314 = vld [vmem:[#allocation6 + $0x170] sm:$0xff]
    %v315 = vld [vmem:[#allocation6 + $0x178] sm:$0xff]
    %v316 = vld [vmem:[#allocation6 + $0x180] sm:$0xff]
    %v317 = vld [vmem:[#allocation6 + $0x188] sm:$0xff]
    %v318 = vld [vmem:[#allocation6 + $0x190] sm:$0xff]
    %v319 = vld [vmem:[#allocation6 + $0x198] sm:$0xff]
    %v320 = vld [vmem:[#allocation6 + $0x1a0] sm:$0xff]
    %v321 = vld [vmem:[#allocation6 + $0x1a8] sm:$0xff]
    %v322 = vld [vmem:[#allocation6 + $0x1b0] sm:$0xff]
    %v323 = vld [vmem:[#allocation6 + $0x1b8] sm:$0xff]
    %v324 = vld [vmem:[#allocation6 + $0x1c0] sm:$0xff]
    %v325 = vld [vmem:[#allocation6 + $0x1c8] sm:$0xff]
    %v326 = vld [vmem:[#allocation6 + $0x1d0] sm:$0xff]
    %v327 = vld [vmem:[#allocation6 + $0x1d8] sm:$0xff]
    %v328 = vld [vmem:[#allocation6 + $0x1e0] sm:$0xff]
    %v329 = vld [vmem:[#allocation6 + $0x1e8] sm:$0xff]
    %v330 = vld [vmem:[#allocation6 + $0x1f0] sm:$0xff]
    %v331 = vld [vmem:[#allocation6 + $0x1f8] sm:$0xff]
    %v332 = vld [vmem:[%s4] sm:$0x1]
    %v334 = vperm.slane %v332, 0
    %336 = vmatpush.msra.mxu0 %v283
    %337 = vmatpush.msra.mxu0 %v282
    %338 = vmatpush.msra.mxu0 %v281
    %339 = vmatpush.msra.mxu0 %v280
    %340 = vmatpush.msra.mxu0 %v279
    %341 = vmatpush.msra.mxu0 %v278
    %342 = vmatpush.msra.mxu0 %v277
    %343 = vmatpush.msra.mxu0 %v276
    %344 = vmatpush.msra.mxu0 %v275
    %345 = vmatpush.msra.mxu0 %v274
    %346 = vmatpush.msra.mxu0 %v273
    %347 = vmatpush.msra.mxu0 %v272
    %348 = vmatpush.msra.mxu0 %v271
    %349 = vmatpush.msra.mxu0 %v270
    %350 = vmatpush.msra.mxu0 %v269
    %351 = vmatpush.msra.mxu0 %v268
    %352 = vmatmul.f32.gmra.mxu0 %v252
    %v353 = vpop.f32.mrf.mxu0
    %v354 = vadd.f32 %v334, %v353
    %355 = vmatmul.f32.gmra.mxu0 %v256
    %v356 = vpop.f32.mrf.mxu0
    %v357 = vadd.f32 %v334, %v356
    %358 = vmatmul.f32.gmra.mxu0 %v260
    %v359 = vpop.f32.mrf.mxu0
    %v360 = vadd.f32 %v334, %v359
    %361 = vmatmul.f32.gmra.mxu0 %v264
    %v362 = vpop.f32.mrf.mxu0
    %v363 = vadd.f32 %v334, %v362
    %364 = vdwg.mxu0
    %365 = vmatpush.msra.mxu0 %v299
    %366 = vmatpush.msra.mxu0 %v298
    %367 = vmatpush.msra.mxu0 %v297
    %368 = vmatpush.msra.mxu0 %v296
    %369 = vmatpush.msra.mxu0 %v295
    %370 = vmatpush.msra.mxu0 %v294
    %371 = vmatpush.msra.mxu0 %v293
    %372 = vmatpush.msra.mxu0 %v292
    %373 = vmatpush.msra.mxu0 %v291
    %374 = vmatpush.msra.mxu0 %v290
    %375 = vmatpush.msra.mxu0 %v289
    %376 = vmatpush.msra.mxu0 %v288
    %377 = vmatpush.msra.mxu0 %v287
    %378 = vmatpush.msra.mxu0 %v286
    %379 = vmatpush.msra.mxu0 %v285
    %380 = vmatpush.msra.mxu0 %v284
    %381 = vmatmul.f32.gmra.mxu0 %v253
    %v382 = vpop.f32.mrf.mxu0
    %v383 = vadd.f32 %v354, %v382
    %384 = vmatmul.f32.gmra.mxu0 %v257
    %v385 = vpop.f32.mrf.mxu0
    %v386 = vadd.f32 %v357, %v385
    %387 = vmatmul.f32.gmra.mxu0 %v261
    %v388 = vpop.f32.mrf.mxu0
    %v389 = vadd.f32 %v360, %v388
    %390 = vmatmul.f32.gmra.mxu0 %v265
    %v391 = vpop.f32.mrf.mxu0
    %v392 = vadd.f32 %v363, %v391
    %393 = vdwg.mxu0
    %394 = vmatpush.msra.mxu0 %v315
    %395 = vmatpush.msra.mxu0 %v314
    %396 = vmatpush.msra.mxu0 %v313
    %397 = vmatpush.msra.mxu0 %v312
    %398 = vmatpush.msra.mxu0 %v311
    %399 = vmatpush.msra.mxu0 %v310
    %400 = vmatpush.msra.mxu0 %v309
    %401 = vmatpush.msra.mxu0 %v308
    %402 = vmatpush.msra.mxu0 %v307
    %403 = vmatpush.msra.mxu0 %v306
    %404 = vmatpush.msra.mxu0 %v305
    %405 = vmatpush.msra.mxu0 %v304
    %406 = vmatpush.msra.mxu0 %v303
    %407 = vmatpush.msra.mxu0 %v302
    %408 = vmatpush.msra.mxu0 %v301
    %409 = vmatpush.msra.mxu0 %v300
    %410 = vmatmul.f32.gmra.mxu0 %v254
    %v411 = vpop.f32.mrf.mxu0
    %v412 = vadd.f32 %v383, %v411
    %413 = vmatmul.f32.gmra.mxu0 %v258
    %v414 = vpop.f32.mrf.mxu0
    %v415 = vadd.f32 %v386, %v414
    %416 = vmatmul.f32.gmra.mxu0 %v262
    %v417 = vpop.f32.mrf.mxu0
    %v418 = vadd.f32 %v389, %v417
    %419 = vmatmul.f32.gmra.mxu0 %v266
    %v420 = vpop.f32.mrf.mxu0
    %v421 = vadd.f32 %v392, %v420
    %422 = vdwg.mxu0
    %423 = vmatpush.msra.mxu0 %v331
    %424 = vmatpush.msra.mxu0 %v330
    %425 = vmatpush.msra.mxu0 %v329
    %426 = vmatpush.msra.mxu0 %v328
    %427 = vmatpush.msra.mxu0 %v327
    %428 = vmatpush.msra.mxu0 %v326
    %429 = vmatpush.msra.mxu0 %v325
    %430 = vmatpush.msra.mxu0 %v324
    %431 = vmatpush.msra.mxu0 %v323
    %432 = vmatpush.msra.mxu0 %v322
    %433 = vmatpush.msra.mxu0 %v321
    %434 = vmatpush.msra.mxu0 %v320
    %435 = vmatpush.msra.mxu0 %v319
    %436 = vmatpush.msra.mxu0 %v318
    %437 = vmatpush.msra.mxu0 %v317
    %438 = vmatpush.msra.mxu0 %v316
    %439 = vmatmul.f32.gmra.mxu0 %v255
    %v440 = vpop.f32.mrf.mxu0
    %v441 = vadd.f32 %v412, %v440
    %442 = vmatmul.f32.gmra.mxu0 %v259
    %v443 = vpop.f32.mrf.mxu0
    %v444 = vadd.f32 %v415, %v443
    %445 = vmatmul.f32.gmra.mxu0 %v263
    %v446 = vpop.f32.mrf.mxu0
    %v447 = vadd.f32 %v418, %v446
    %448 = vmatmul.f32.gmra.mxu0 %v267
    %v449 = vpop.f32.mrf.mxu0
    %v450 = vadd.f32 %v421, %v449
    %451 = vdwg.mxu0
    %v452 = vmax.f32 %v441, 0.0
    %v453 = vmax.f32 %v444, 0.0
    %v454 = vmax.f32 %v447, 0.0
    %v455 = vmax.f32 %v450, 0.0
    %456 = vst [vmem:[#allocation2 + $0x1] sm:$0xff] %v452
    %457 = vst [vmem:[#allocation2 + $0x9] sm:$0xff] %v453
    %458 = vst [vmem:[#allocation2 + $0x19] sm:$0xff] %v454
    %459 = vst [vmem:[#allocation2 + $0x21] sm:$0xff] %v455
    %v460 = vld [vmem:[#allocation2] sm:$0xff]
    %v461 = vld [vmem:[#allocation2 + $0x8] sm:$0xff]
    %v462 = vld [vmem:[#allocation2 + $0x18] sm:$0xff]
    %v463 = vld [vmem:[#allocation2 + $0x20] sm:$0xff]
    %464 = vst [vmem:[#allocation3] sm:$0xff] %v460
    %465 = vst [vmem:[#allocation3 + $0x20] sm:$0xff] %v461
    %466 = vst [vmem:[#allocation3 + $0x40] sm:$0xff] %v462
    %467 = vst [vmem:[#allocation3 + $0x60] sm:$0xff] %v463
    %v468 = vld [vmem:[#allocation2 + $0x1] sm:$0xff]
    %v469 = vld [vmem:[#allocation2 + $0x9] sm:$0xff]
    %v470 = vld [vmem:[#allocation2 + $0x19] sm:$0xff]
    %v471 = vld [vmem:[#allocation2 + $0x21] sm:$0xff]
    %472 = vst [vmem:[#allocation3 + $0x8] sm:$0xff] %v468
    %473 = vst [vmem:[#allocation3 + $0x28] sm:$0xff] %v469
    %474 = vst [vmem:[#allocation3 + $0x48] sm:$0xff] %v470
    %475 = vst [vmem:[#allocation3 + $0x68] sm:$0xff] %v471
    %v476 = vld [vmem:[#allocation2 + $0x2] sm:$0xff]
    %v477 = vld [vmem:[#allocation2 + $0xa] sm:$0xff]
    %v478 = vld [vmem:[#allocation2 + $0x1a] sm:$0xff]
    %v479 = vld [vmem:[#allocation2 + $0x22] sm:$0xff]
    %480 = vst [vmem:[#allocation3 + $0x10] sm:$0xff] %v476
    %481 = vst [vmem:[#allocation3 + $0x30] sm:$0xff] %v477
    %482 = vst [vmem:[#allocation3 + $0x50] sm:$0xff] %v478
    %483 = vst [vmem:[#allocation3 + $0x70] sm:$0xff] %v479
    %v484 = vld [vmem:[#allocation2 + $0x3] sm:$0xff]
    %v485 = vld [vmem:[#allocation2 + $0xb] sm:$0xff]
    %v486 = vld [vmem:[#allocation2 + $0x1b] sm:$0xff]
    %v487 = vld [vmem:[#allocation2 + $0x23] sm:$0xff]
    %488 = vst [vmem:[#allocation3 + $0x18] sm:$0xff] %v484
    %489 = vst [vmem:[#allocation3 + $0x38] sm:$0xff] %v485
    %490 = vst [vmem:[#allocation3 + $0x58] sm:$0xff] %v486
    %491 = vst [vmem:[#allocation3 + $0x78] sm:$0xff] %v487
    %v492 = vld [vmem:[#allocation3] sm:$0xff]
    %v493 = vld [vmem:[#allocation3 + $0x8] sm:$0xff]
    %v494 = vld [vmem:[#allocation3 + $0x10] sm:$0xff]
    %v495 = vld [vmem:[#allocation3 + $0x18] sm:$0xff]
    %v496 = vld [vmem:[#allocation3 + $0x20] sm:$0xff]
    %v497 = vld [vmem:[#allocation3 + $0x28] sm:$0xff]
    %v498 = vld [vmem:[#allocation3 + $0x30] sm:$0xff]
    %v499 = vld [vmem:[#allocation3 + $0x38] sm:$0xff]
    %v500 = vld [vmem:[#allocation3 + $0x40] sm:$0xff]
    %v501 = vld [vmem:[#allocation3 + $0x48] sm:$0xff]
    %v502 = vld [vmem:[#allocation3 + $0x50] sm:$0xff]
    %v503 = vld [vmem:[#allocation3 + $0x58] sm:$0xff]
    %v504 = vld [vmem:[#allocation3 + $0x60] sm:$0xff]
    %v505 = vld [vmem:[#allocation3 + $0x68] sm:$0xff]
    %v506 = vld [vmem:[#allocation3 + $0x70] sm:$0xff]
    %v507 = vld [vmem:[#allocation3 + $0x78] sm:$0xff]
    %v508 = vld [vmem:[#allocation8] sm:$0xff]
    %v509 = vld [vmem:[#allocation8 + $0x8] sm:$0xff]
    %v510 = vld [vmem:[#allocation8 + $0x10] sm:$0xff]
    %v511 = vld [vmem:[#allocation8 + $0x18] sm:$0xff]
    %v512 = vld [vmem:[#allocation8 + $0x20] sm:$0xff]
    %v513 = vld [vmem:[#allocation8 + $0x28] sm:$0xff]
    %v514 = vld [vmem:[#allocation8 + $0x30] sm:$0xff]
    %v515 = vld [vmem:[#allocation8 + $0x38] sm:$0xff]
    %v516 = vld [vmem:[#allocation8 + $0x40] sm:$0xff]
    %v517 = vld [vmem:[#allocation8 + $0x48] sm:$0xff]
    %v518 = vld [vmem:[#allocation8 + $0x50] sm:$0xff]
    %v519 = vld [vmem:[#allocation8 + $0x58] sm:$0xff]
    %v520 = vld [vmem:[#allocation8 + $0x60] sm:$0xff]
    %v521 = vld [vmem:[#allocation8 + $0x68] sm:$0xff]
    %v522 = vld [vmem:[#allocation8 + $0x70] sm:$0xff]
    %v523 = vld [vmem:[#allocation8 + $0x78] sm:$0xff]
    %v524 = vld [vmem:[#allocation8 + $0x80] sm:$0xff]
    %v525 = vld [vmem:[#allocation8 + $0x88] sm:$0xff]
    %v526 = vld [vmem:[#allocation8 + $0x90] sm:$0xff]
    %v527 = vld [vmem:[#allocation8 + $0x98] sm:$0xff]
    %v528 = vld [vmem:[#allocation8 + $0xa0] sm:$0xff]
    %v529 = vld [vmem:[#allocation8 + $0xa8] sm:$0xff]
    %v530 = vld [vmem:[#allocation8 + $0xb0] sm:$0xff]
    %v531 = vld [vmem:[#allocation8 + $0xb8] sm:$0xff]
    %v532 = vld [vmem:[#allocation8 + $0xc0] sm:$0xff]
    %v533 = vld [vmem:[#allocation8 + $0xc8] sm:$0xff]
    %v534 = vld [vmem:[#allocation8 + $0xd0] sm:$0xff]
    %v535 = vld [vmem:[#allocation8 + $0xd8] sm:$0xff]
    %v536 = vld [vmem:[#allocation8 + $0xe0] sm:$0xff]
    %v537 = vld [vmem:[#allocation8 + $0xe8] sm:$0xff]
    %v538 = vld [vmem:[#allocation8 + $0xf0] sm:$0xff]
    %v539 = vld [vmem:[#allocation8 + $0xf8] sm:$0xff]
    %v540 = vld [vmem:[#allocation8 + $0x100] sm:$0xff]
    %v541 = vld [vmem:[#allocation8 + $0x108] sm:$0xff]
    %v542 = vld [vmem:[#allocation8 + $0x110] sm:$0xff]
    %v543 = vld [vmem:[#allocation8 + $0x118] sm:$0xff]
    %v544 = vld [vmem:[#allocation8 + $0x120] sm:$0xff]
    %v545 = vld [vmem:[#allocation8 + $0x128] sm:$0xff]
    %v546 = vld [vmem:[#allocation8 + $0x130] sm:$0xff]
    %v547 = vld [vmem:[#allocation8 + $0x138] sm:$0xff]
    %v548 = vld [vmem:[#allocation8 + $0x140] sm:$0xff]
    %v549 = vld [vmem:[#allocation8 + $0x148] sm:$0xff]
    %v550 = vld [vmem:[#allocation8 + $0x150] sm:$0xff]
    %v551 = vld [vmem:[#allocation8 + $0x158] sm:$0xff]
    %v552 = vld [vmem:[#allocation8 + $0x160] sm:$0xff]
    %v553 = vld [vmem:[#allocation8 + $0x168] sm:$0xff]
    %v554 = vld [vmem:[#allocation8 + $0x170] sm:$0xff]
    %v555 = vld [vmem:[#allocation8 + $0x178] sm:$0xff]
    %v556 = vld [vmem:[#allocation8 + $0x180] sm:$0xff]
    %v557 = vld [vmem:[#allocation8 + $0x188] sm:$0xff]
    %v558 = vld [vmem:[#allocation8 + $0x190] sm:$0xff]
    %v559 = vld [vmem:[#allocation8 + $0x198] sm:$0xff]
    %v560 = vld [vmem:[#allocation8 + $0x1a0] sm:$0xff]
    %v561 = vld [vmem:[#allocation8 + $0x1a8] sm:$0xff]
    %v562 = vld [vmem:[#allocation8 + $0x1b0] sm:$0xff]
    %v563 = vld [vmem:[#allocation8 + $0x1b8] sm:$0xff]
    %v564 = vld [vmem:[#allocation8 + $0x1c0] sm:$0xff]
    %v565 = vld [vmem:[#allocation8 + $0x1c8] sm:$0xff]
    %v566 = vld [vmem:[#allocation8 + $0x1d0] sm:$0xff]
    %v567 = vld [vmem:[#allocation8 + $0x1d8] sm:$0xff]
    %v568 = vld [vmem:[#allocation8 + $0x1e0] sm:$0xff]
    %v569 = vld [vmem:[#allocation8 + $0x1e8] sm:$0xff]
    %v570 = vld [vmem:[#allocation8 + $0x1f0] sm:$0xff]
    %v571 = vld [vmem:[#allocation8 + $0x1f8] sm:$0xff]
    %v572 = vld [vmem:[%s6] sm:$0x1]
    %v574 = vperm.slane %v572, 0
    %576 = vmatpush.msra.mxu0 %v523
    %577 = vmatpush.msra.mxu0 %v522
    %578 = vmatpush.msra.mxu0 %v521
    %579 = vmatpush.msra.mxu0 %v520
    %580 = vmatpush.msra.mxu0 %v519
    %581 = vmatpush.msra.mxu0 %v518
    %582 = vmatpush.msra.mxu0 %v517
    %583 = vmatpush.msra.mxu0 %v516
    %584 = vmatpush.msra.mxu0 %v515
    %585 = vmatpush.msra.mxu0 %v514
    %586 = vmatpush.msra.mxu0 %v513
    %587 = vmatpush.msra.mxu0 %v512
    %588 = vmatpush.msra.mxu0 %v511
    %589 = vmatpush.msra.mxu0 %v510
    %590 = vmatpush.msra.mxu0 %v509
    %591 = vmatpush.msra.mxu0 %v508
    %592 = vmatmul.f32.gmra.mxu0 %v492
    %v593 = vpop.f32.mrf.mxu0
    %v594 = vadd.f32 %v574, %v593
    %595 = vmatmul.f32.gmra.mxu0 %v496
    %v596 = vpop.f32.mrf.mxu0
    %v597 = vadd.f32 %v574, %v596
    %598 = vmatmul.f32.gmra.mxu0 %v500
    %v599 = vpop.f32.mrf.mxu0
    %v600 = vadd.f32 %v574, %v599
    %601 = vmatmul.f32.gmra.mxu0 %v504
    %v602 = vpop.f32.mrf.mxu0
    %v603 = vadd.f32 %v574, %v602
    %604 = vdwg.mxu0
    %605 = vmatpush.msra.mxu0 %v539
    %606 = vmatpush.msra.mxu0 %v538
    %607 = vmatpush.msra.mxu0 %v537
    %608 = vmatpush.msra.mxu0 %v536
    %609 = vmatpush.msra.mxu0 %v535
    %610 = vmatpush.msra.mxu0 %v534
    %611 = vmatpush.msra.mxu0 %v533
    %612 = vmatpush.msra.mxu0 %v532
    %613 = vmatpush.msra.mxu0 %v531
    %614 = vmatpush.msra.mxu0 %v530
    %615 = vmatpush.msra.mxu0 %v529
    %616 = vmatpush.msra.mxu0 %v528
    %617 = vmatpush.msra.mxu0 %v527
    %618 = vmatpush.msra.mxu0 %v526
    %619 = vmatpush.msra.mxu0 %v525
    %620 = vmatpush.msra.mxu0 %v524
    %621 = vmatmul.f32.gmra.mxu0 %v493
    %v622 = vpop.f32.mrf.mxu0
    %v623 = vadd.f32 %v594, %v622
    %624 = vmatmul.f32.gmra.mxu0 %v497
    %v625 = vpop.f32.mrf.mxu0
    %v626 = vadd.f32 %v597, %v625
    %627 = vmatmul.f32.gmra.mxu0 %v501
    %v628 = vpop.f32.mrf.mxu0
    %v629 = vadd.f32 %v600, %v628
    %630 = vmatmul.f32.gmra.mxu0 %v505
    %v631 = vpop.f32.mrf.mxu0
    %v632 = vadd.f32 %v603, %v631
    %633 = vdwg.mxu0
    %634 = vmatpush.msra.mxu0 %v555
    %635 = vmatpush.msra.mxu0 %v554
    %636 = vmatpush.msra.mxu0 %v553
    %637 = vmatpush.msra.mxu0 %v552
    %638 = vmatpush.msra.mxu0 %v551
    %639 = vmatpush.msra.mxu0 %v550
    %640 = vmatpush.msra.mxu0 %v549
    %641 = vmatpush.msra.mxu0 %v548
    %642 = vmatpush.msra.mxu0 %v547
    %643 = vmatpush.msra.mxu0 %v546
    %644 = vmatpush.msra.mxu0 %v545
    %645 = vmatpush.msra.mxu0 %v544
    %646 = vmatpush.msra.mxu0 %v543
    %647 = vmatpush.msra.mxu0 %v542
    %648 = vmatpush.msra.mxu0 %v541
    %649 = vmatpush.msra.mxu0 %v540
    %650 = vmatmul.f32.gmra.mxu0 %v494
    %v651 = vpop.f32.mrf.mxu0
    %v652 = vadd.f32 %v623, %v651
    %653 = vmatmul.f32.gmra.mxu0 %v498
    %v654 = vpop.f32.mrf.mxu0
    %v655 = vadd.f32 %v626, %v654
    %656 = vmatmul.f32.gmra.mxu0 %v502
    %v657 = vpop.f32.mrf.mxu0
    %v658 = vadd.f32 %v629, %v657
    %659 = vmatmul.f32.gmra.mxu0 %v506
    %v660 = vpop.f32.mrf.mxu0
    %v661 = vadd.f32 %v632, %v660
    %662 = vdwg.mxu0
    %663 = vmatpush.msra.mxu0 %v571
    %664 = vmatpush.msra.mxu0 %v570
    %665 = vmatpush.msra.mxu0 %v569
    %666 = vmatpush.msra.mxu0 %v568
    %667 = vmatpush.msra.mxu0 %v567
    %668 = vmatpush.msra.mxu0 %v566
    %669 = vmatpush.msra.mxu0 %v565
    %670 = vmatpush.msra.mxu0 %v564
    %671 = vmatpush.msra.mxu0 %v563
    %672 = vmatpush.msra.mxu0 %v562
    %673 = vmatpush.msra.mxu0 %v561
    %674 = vmatpush.msra.mxu0 %v560
    %675 = vmatpush.msra.mxu0 %v559
    %676 = vmatpush.msra.mxu0 %v558
    %677 = vmatpush.msra.mxu0 %v557
    %678 = vmatpush.msra.mxu0 %v556
    %679 = vmatmul.f32.gmra.mxu0 %v495
    %v680 = vpop.f32.mrf.mxu0
    %v681 = vadd.f32 %v652, %v680
    %682 = vmatmul.f32.gmra.mxu0 %v499
    %v683 = vpop.f32.mrf.mxu0
    %v684 = vadd.f32 %v655, %v683
    %685 = vmatmul.f32.gmra.mxu0 %v503
    %v686 = vpop.f32.mrf.mxu0
    %v687 = vadd.f32 %v658, %v686
    %688 = vmatmul.f32.gmra.mxu0 %v507
    %v689 = vpop.f32.mrf.mxu0
    %v690 = vadd.f32 %v661, %v689
    %691 = vdwg.mxu0
    %v692 = vmax.f32 %v681, 0.0
    %v693 = vmax.f32 %v684, 0.0
    %v694 = vmax.f32 %v687, 0.0
    %v695 = vmax.f32 %v690, 0.0
    %696 = vst [vmem:[#allocation2 + $0x1] sm:$0xff] %v692
    %697 = vst [vmem:[#allocation2 + $0x9] sm:$0xff] %v693
    %698 = vst [vmem:[#allocation2 + $0x19] sm:$0xff] %v694
    %699 = vst [vmem:[#allocation2 + $0x21] sm:$0xff] %v695
    %v700 = vld [vmem:[#allocation2] sm:$0xff]
    %v701 = vld [vmem:[#allocation2 + $0x8] sm:$0xff]
    %v702 = vld [vmem:[#allocation2 + $0x18] sm:$0xff]
    %v703 = vld [vmem:[#allocation2 + $0x20] sm:$0xff]
    %704 = vst [vmem:[#allocation3] sm:$0xff] %v700
    %705 = vst [vmem:[#allocation3 + $0x20] sm:$0xff] %v701
    %706 = vst [vmem:[#allocation3 + $0x40] sm:$0xff] %v702
    %707 = vst [vmem:[#allocation3 + $0x60] sm:$0xff] %v703
    %v708 = vld [vmem:[#allocation2 + $0x1] sm:$0xff]
    %v709 = vld [vmem:[#allocation2 + $0x9] sm:$0xff]
    %v710 = vld [vmem:[#allocation2 + $0x19] sm:$0xff]
    %v711 = vld [vmem:[#allocation2 + $0x21] sm:$0xff]
    %712 = vst [vmem:[#allocation3 + $0x8] sm:$0xff] %v708
    %713 = vst [vmem:[#allocation3 + $0x28] sm:$0xff] %v709
    %714 = vst [vmem:[#allocation3 + $0x48] sm:$0xff] %v710
    %715 = vst [vmem:[#allocation3 + $0x68] sm:$0xff] %v711
    %v716 = vld [vmem:[#allocation2 + $0x2] sm:$0xff]
    %v717 = vld [vmem:[#allocation2 + $0xa] sm:$0xff]
    %v718 = vld [vmem:[#allocation2 + $0x1a] sm:$0xff]
    %v719 = vld [vmem:[#allocation2 + $0x22] sm:$0xff]
    %720 = vst [vmem:[#allocation3 + $0x10] sm:$0xff] %v716
    %721 = vst [vmem:[#allocation3 + $0x30] sm:$0xff] %v717
    %722 = vst [vmem:[#allocation3 + $0x50] sm:$0xff] %v718
    %723 = vst [vmem:[#allocation3 + $0x70] sm:$0xff] %v719
    %v724 = vld [vmem:[#allocation2 + $0x3] sm:$0xff]
    %v725 = vld [vmem:[#allocation2 + $0xb] sm:$0xff]
    %v726 = vld [vmem:[#allocation2 + $0x1b] sm:$0xff]
    %v727 = vld [vmem:[#allocation2 + $0x23] sm:$0xff]
    %728 = vst [vmem:[#allocation3 + $0x18] sm:$0xff] %v724
    %729 = vst [vmem:[#allocation3 + $0x38] sm:$0xff] %v725
    %730 = vst [vmem:[#allocation3 + $0x58] sm:$0xff] %v726
    %731 = vst [vmem:[#allocation3 + $0x78] sm:$0xff] %v727
    %v732 = vld [vmem:[#allocation3] sm:$0xff]
    %v733 = vld [vmem:[#allocation3 + $0x8] sm:$0xff]
    %v734 = vld [vmem:[#allocation3 + $0x10] sm:$0xff]
    %v735 = vld [vmem:[#allocation3 + $0x18] sm:$0xff]
    %v736 = vld [vmem:[#allocation3 + $0x20] sm:$0xff]
    %v737 = vld [vmem:[#allocation3 + $0x28] sm:$0xff]
    %v738 = vld [vmem:[#allocation3 + $0x30] sm:$0xff]
    %v739 = vld [vmem:[#allocation3 + $0x38] sm:$0xff]
    %v740 = vld [vmem:[#allocation3 + $0x40] sm:$0xff]
    %v741 = vld [vmem:[#allocation3 + $0x48] sm:$0xff]
    %v742 = vld [vmem:[#allocation3 + $0x50] sm:$0xff]
    %v743 = vld [vmem:[#allocation3 + $0x58] sm:$0xff]
    %v744 = vld [vmem:[#allocation3 + $0x60] sm:$0xff]
    %v745 = vld [vmem:[#allocation3 + $0x68] sm:$0xff]
    %v746 = vld [vmem:[#allocation3 + $0x70] sm:$0xff]
    %v747 = vld [vmem:[#allocation3 + $0x78] sm:$0xff]
    %v748 = vld [vmem:[#allocation10] sm:$0xff]
    %v749 = vld [vmem:[#allocation10 + $0x8] sm:$0xff]
    %v750 = vld [vmem:[#allocation10 + $0x10] sm:$0xff]
    %v751 = vld [vmem:[#allocation10 + $0x18] sm:$0xff]
    %v752 = vld [vmem:[#allocation10 + $0x20] sm:$0xff]
    %v753 = vld [vmem:[#allocation10 + $0x28] sm:$0xff]
    %v754 = vld [vmem:[#allocation10 + $0x30] sm:$0xff]
    %v755 = vld [vmem:[#allocation10 + $0x38] sm:$0xff]
    %v756 = vld [vmem:[#allocation10 + $0x40] sm:$0xff]
    %v757 = vld [vmem:[#allocation10 + $0x48] sm:$0xff]
    %v758 = vld [vmem:[#allocation10 + $0x50] sm:$0xff]
    %v759 = vld [vmem:[#allocation10 + $0x58] sm:$0xff]
    %v760 = vld [vmem:[#allocation10 + $0x60] sm:$0xff]
    %v761 = vld [vmem:[#allocation10 + $0x68] sm:$0xff]
    %v762 = vld [vmem:[#allocation10 + $0x70] sm:$0xff]
    %v763 = vld [vmem:[#allocation10 + $0x78] sm:$0xff]
    %v764 = vld [vmem:[#allocation10 + $0x80] sm:$0xff]
    %v765 = vld [vmem:[#allocation10 + $0x88] sm:$0xff]
    %v766 = vld [vmem:[#allocation10 + $0x90] sm:$0xff]
    %v767 = vld [vmem:[#allocation10 + $0x98] sm:$0xff]
    %v768 = vld [vmem:[#allocation10 + $0xa0] sm:$0xff]
    %v769 = vld [vmem:[#allocation10 + $0xa8] sm:$0xff]
    %v770 = vld [vmem:[#allocation10 + $0xb0] sm:$0xff]
    %v771 = vld [vmem:[#allocation10 + $0xb8] sm:$0xff]
    %v772 = vld [vmem:[#allocation10 + $0xc0] sm:$0xff]
    %v773 = vld [vmem:[#allocation10 + $0xc8] sm:$0xff]
    %v774 = vld [vmem:[#allocation10 + $0xd0] sm:$0xff]
    %v775 = vld [vmem:[#allocation10 + $0xd8] sm:$0xff]
    %v776 = vld [vmem:[#allocation10 + $0xe0] sm:$0xff]
    %v777 = vld [vmem:[#allocation10 + $0xe8] sm:$0xff]
    %v778 = vld [vmem:[#allocation10 + $0xf0] sm:$0xff]
    %v779 = vld [vmem:[#allocation10 + $0xf8] sm:$0xff]
    %v780 = vld [vmem:[#allocation10 + $0x100] sm:$0xff]
    %v781 = vld [vmem:[#allocation10 + $0x108] sm:$0xff]
    %v782 = vld [vmem:[#allocation10 + $0x110] sm:$0xff]
    %v783 = vld [vmem:[#allocation10 + $0x118] sm:$0xff]
    %v784 = vld [vmem:[#allocation10 + $0x120] sm:$0xff]
    %v785 = vld [vmem:[#allocation10 + $0x128] sm:$0xff]
    %v786 = vld [vmem:[#allocation10 + $0x130] sm:$0xff]
    %v787 = vld [vmem:[#allocation10 + $0x138] sm:$0xff]
    %v788 = vld [vmem:[#allocation10 + $0x140] sm:$0xff]
    %v789 = vld [vmem:[#allocation10 + $0x148] sm:$0xff]
    %v790 = vld [vmem:[#allocation10 + $0x150] sm:$0xff]
    %v791 = vld [vmem:[#allocation10 + $0x158] sm:$0xff]
    %v792 = vld [vmem:[#allocation10 + $0x160] sm:$0xff]
    %v793 = vld [vmem:[#allocation10 + $0x168] sm:$0xff]
    %v794 = vld [vmem:[#allocation10 + $0x170] sm:$0xff]
    %v795 = vld [vmem:[#allocation10 + $0x178] sm:$0xff]
    %v796 = vld [vmem:[#allocation10 + $0x180] sm:$0xff]
    %v797 = vld [vmem:[#allocation10 + $0x188] sm:$0xff]
    %v798 = vld [vmem:[#allocation10 + $0x190] sm:$0xff]
    %v799 = vld [vmem:[#allocation10 + $0x198] sm:$0xff]
    %v800 = vld [vmem:[#allocation10 + $0x1a0] sm:$0xff]
    %v801 = vld [vmem:[#allocation10 + $0x1a8] sm:$0xff]
    %v802 = vld [vmem:[#allocation10 + $0x1b0] sm:$0xff]
    %v803 = vld [vmem:[#allocation10 + $0x1b8] sm:$0xff]
    %v804 = vld [vmem:[#allocation10 + $0x1c0] sm:$0xff]
    %v805 = vld [vmem:[#allocation10 + $0x1c8] sm:$0xff]
    %v806 = vld [vmem:[#allocation10 + $0x1d0] sm:$0xff]
    %v807 = vld [vmem:[#allocation10 + $0x1d8] sm:$0xff]
    %v808 = vld [vmem:[#allocation10 + $0x1e0] sm:$0xff]
    %v809 = vld [vmem:[#allocation10 + $0x1e8] sm:$0xff]
    %v810 = vld [vmem:[#allocation10 + $0x1f0] sm:$0xff]
    %v811 = vld [vmem:[#allocation10 + $0x1f8] sm:$0xff]
    %v812 = vld [vmem:[%s8] sm:$0x1]
    %v814 = vperm.slane %v812, 0
    %816 = vmatpush.msra.mxu0 %v763
    %817 = vmatpush.msra.mxu0 %v762
    %818 = vmatpush.msra.mxu0 %v761
    %819 = vmatpush.msra.mxu0 %v760
    %820 = vmatpush.msra.mxu0 %v759
    %821 = vmatpush.msra.mxu0 %v758
    %822 = vmatpush.msra.mxu0 %v757
    %823 = vmatpush.msra.mxu0 %v756
    %824 = vmatpush.msra.mxu0 %v755
    %825 = vmatpush.msra.mxu0 %v754
    %826 = vmatpush.msra.mxu0 %v753
    %827 = vmatpush.msra.mxu0 %v752
    %828 = vmatpush.msra.mxu0 %v751
    %829 = vmatpush.msra.mxu0 %v750
    %830 = vmatpush.msra.mxu0 %v749
    %831 = vmatpush.msra.mxu0 %v748
    %832 = vmatmul.f32.gmra.mxu0 %v732
    %v833 = vpop.f32.mrf.mxu0
    %v834 = vadd.f32 %v814, %v833
    %835 = vmatmul.f32.gmra.mxu0 %v736
    %v836 = vpop.f32.mrf.mxu0
    %v837 = vadd.f32 %v814, %v836
    %838 = vmatmul.f32.gmra.mxu0 %v740
    %v839 = vpop.f32.mrf.mxu0
    %v840 = vadd.f32 %v814, %v839
    %841 = vmatmul.f32.gmra.mxu0 %v744
    %v842 = vpop.f32.mrf.mxu0
    %v843 = vadd.f32 %v814, %v842
    %844 = vdwg.mxu0
    %845 = vmatpush.msra.mxu0 %v779
    %846 = vmatpush.msra.mxu0 %v778
    %847 = vmatpush.msra.mxu0 %v777
    %848 = vmatpush.msra.mxu0 %v776
    %849 = vmatpush.msra.mxu0 %v775
    %850 = vmatpush.msra.mxu0 %v774
    %851 = vmatpush.msra.mxu0 %v773
    %852 = vmatpush.msra.mxu0 %v772
    %853 = vmatpush.msra.mxu0 %v771
    %854 = vmatpush.msra.mxu0 %v770
    %855 = vmatpush.msra.mxu0 %v769
    %856 = vmatpush.msra.mxu0 %v768
    %857 = vmatpush.msra.mxu0 %v767
    %858 = vmatpush.msra.mxu0 %v766
    %859 = vmatpush.msra.mxu0 %v765
    %860 = vmatpush.msra.mxu0 %v764
    %861 = vmatmul.f32.gmra.mxu0 %v733
    %v862 = vpop.f32.mrf.mxu0
    %v863 = vadd.f32 %v834, %v862
    %864 = vmatmul.f32.gmra.mxu0 %v737
    %v865 = vpop.f32.mrf.mxu0
    %v866 = vadd.f32 %v837, %v865
    %867 = vmatmul.f32.gmra.mxu0 %v741
    %v868 = vpop.f32.mrf.mxu0
    %v869 = vadd.f32 %v840, %v868
    %870 = vmatmul.f32.gmra.mxu0 %v745
    %v871 = vpop.f32.mrf.mxu0
    %v872 = vadd.f32 %v843, %v871
    %873 = vdwg.mxu0
    %874 = vmatpush.msra.mxu0 %v795
    %875 = vmatpush.msra.mxu0 %v794
    %876 = vmatpush.msra.mxu0 %v793
    %877 = vmatpush.msra.mxu0 %v792
    %878 = vmatpush.msra.mxu0 %v791
    %879 = vmatpush.msra.mxu0 %v790
    %880 = vmatpush.msra.mxu0 %v789
    %881 = vmatpush.msra.mxu0 %v788
    %882 = vmatpush.msra.mxu0 %v787
    %883 = vmatpush.msra.mxu0 %v786
    %884 = vmatpush.msra.mxu0 %v785
    %885 = vmatpush.msra.mxu0 %v784
    %886 = vmatpush.msra.mxu0 %v783
    %887 = vmatpush.msra.mxu0 %v782
    %888 = vmatpush.msra.mxu0 %v781
    %889 = vmatpush.msra.mxu0 %v780
    %890 = vmatmul.f32.gmra.mxu0 %v734
    %v891 = vpop.f32.mrf.mxu0
    %v892 = vadd.f32 %v863, %v891
    %893 = vmatmul.f32.gmra.mxu0 %v738
    %v894 = vpop.f32.mrf.mxu0
    %v895 = vadd.f32 %v866, %v894
    %896 = vmatmul.f32.gmra.mxu0 %v742
    %v897 = vpop.f32.mrf.mxu0
    %v898 = vadd.f32 %v869, %v897
    %899 = vmatmul.f32.gmra.mxu0 %v746
    %v900 = vpop.f32.mrf.mxu0
    %v901 = vadd.f32 %v872, %v900
    %902 = vdwg.mxu0
    %903 = vmatpush.msra.mxu0 %v811
    %904 = vmatpush.msra.mxu0 %v810
    %905 = vmatpush.msra.mxu0 %v809
    %906 = vmatpush.msra.mxu0 %v808
    %907 = vmatpush.msra.mxu0 %v807
    %908 = vmatpush.msra.mxu0 %v806
    %909 = vmatpush.msra.mxu0 %v805
    %910 = vmatpush.msra.mxu0 %v804
    %911 = vmatpush.msra.mxu0 %v803
    %912 = vmatpush.msra.mxu0 %v802
    %913 = vmatpush.msra.mxu0 %v801
    %914 = vmatpush.msra.mxu0 %v800
    %915 = vmatpush.msra.mxu0 %v799
    %916 = vmatpush.msra.mxu0 %v798
    %917 = vmatpush.msra.mxu0 %v797
    %918 = vmatpush.msra.mxu0 %v796
    %919 = vmatmul.f32.gmra.mxu0 %v735
    %v920 = vpop.f32.mrf.mxu0
    %v921 = vadd.f32 %v892, %v920
    %922 = vmatmul.f32.gmra.mxu0 %v739
    %v923 = vpop.f32.mrf.mxu0
    %v924 = vadd.f32 %v895, %v923
    %925 = vmatmul.f32.gmra.mxu0 %v743
    %v926 = vpop.f32.mrf.mxu0
    %v927 = vadd.f32 %v898, %v926
    %928 = vmatmul.f32.gmra.mxu0 %v747
    %v929 = vpop.f32.mrf.mxu0
    %v930 = vadd.f32 %v901, %v929
    %931 = vdwg.mxu0
    %v932 = vmax.f32 %v921, 0.0
    %v933 = vmax.f32 %v924, 0.0
    %v934 = vmax.f32 %v927, 0.0
    %v935 = vmax.f32 %v930, 0.0
    %vm938 = vcmask 1044484
    %v939 = vsel %vm938, %v932, %v932
    %vm940 = vcmask 1046534
    %v941 = vsel %vm940, %v932, %v939
    %v942 = vrot.slane %v934, 7
    %vm943 = vcmask 1041409
    %v944 = vsel %vm943, %v942, %v941
    %vm945 = vcmask 1043459
    %v946 = vsel %vm945, %v942, %v944
    %vm947 = vcmask 1045509
    %v948 = vsel %vm947, %v942, %v946
    %vm949 = vcmask 1047559
    %v950 = vsel %vm949, %v942, %v948
    %952 = vst [vmem:[#allocation4] sm:$0x3] %v950
    %v953 = vrot.slane %v932, 1
    %v954 = vsel %vm938, %v953, %v953
    %v955 = vsel %vm940, %v953, %v954
    %v956 = vsel %vm943, %v934, %v955
    %v957 = vsel %vm945, %v934, %v956
    %v958 = vsel %vm947, %v934, %v957
    %v959 = vsel %vm949, %v934, %v958
    %961 = vst [vmem:[#allocation4 + $0x2] sm:$0x3] %v959
    %962 = vst.sshfl [vmem:[#allocation1] sm:$0xff pattern:$0x73625140] %v932
    %s963 = scalar_lea.vmem [#allocation1], 1
    %v964 = vld [vmem:[%s963] ss:$4 sm:$0xff]
    %965 = vst.sshfl [vmem:[#allocation1 + $0x20] sm:$0xff pattern:$0x73625140] %v934
    %s966 = scalar_lea.vmem [#allocation1], 33
    %v967 = vld [vmem:[%s966] ss:$4 sm:$0xff]
    %v968 = vsel %vm938, %v964, %v964
    %v969 = vsel %vm940, %v964, %v968
    %v970 = vrot.slane %v967, 7
    %v971 = vsel %vm943, %v970, %v969
    %v972 = vsel %vm945, %v970, %v971
    %v973 = vsel %vm947, %v970, %v972
    %v974 = vsel %vm949, %v970, %v973
    %976 = vst [vmem:[#allocation4 + $0x4] sm:$0x3] %v974
    %977 = vst.sshfl [vmem:[#allocation1] sm:$0xff pattern:$0x73625140] %v932
    %s978 = scalar_lea.vmem [#allocation1], 1
    %v979 = vld [vmem:[%s978] ss:$4 sm:$0xff]
    %980 = vst.sshfl [vmem:[#allocation1 + $0x20] sm:$0xff pattern:$0x73625140] %v934
    %s981 = scalar_lea.vmem [#allocation1], 33
    %v982 = vld [vmem:[%s981] ss:$4 sm:$0xff]
    %v983 = vrot.slane %v979, 1
    %v984 = vsel %vm938, %v983, %v983
    %v985 = vsel %vm940, %v983, %v984
    %v986 = vsel %vm943, %v982, %v985
    %v987 = vsel %vm945, %v982, %v986
    %v988 = vsel %vm947, %v982, %v987
    %v989 = vsel %vm949, %v982, %v988
    %991 = vst [vmem:[#allocation4 + $0x6] sm:$0x3] %v989
    %992 = vst.sshfl [vmem:[#allocation1] sm:$0xff pattern:$0x73625140] %v932
    %s993 = scalar_lea.vmem [#allocation1], 2
    %v994 = vld [vmem:[%s993] ss:$4 sm:$0xff]
    %995 = vst.sshfl [vmem:[#allocation1 + $0x20] sm:$0xff pattern:$0x73625140] %v934
    %s996 = scalar_lea.vmem [#allocation1], 34
    %v997 = vld [vmem:[%s996] ss:$4 sm:$0xff]
    %v998 = vsel %vm938, %v994, %v994
    %v999 = vsel %vm940, %v994, %v998
    %v1000 = vrot.slane %v997, 7
    %v1001 = vsel %vm943, %v1000, %v999
    %v1002 = vsel %vm945, %v1000, %v1001
    %v1003 = vsel %vm947, %v1000, %v1002
    %v1004 = vsel %vm949, %v1000, %v1003
    %1006 = vst [vmem:[#allocation4 + $0x8] sm:$0x3] %v1004
    %1007 = vst.sshfl [vmem:[#allocation1] sm:$0xff pattern:$0x73625140] %v932
    %s1008 = scalar_lea.vmem [#allocation1], 2
    %v1009 = vld [vmem:[%s1008] ss:$4 sm:$0xff]
    %1010 = vst.sshfl [vmem:[#allocation1 + $0x20] sm:$0xff pattern:$0x73625140] %v934
    %s1011 = scalar_lea.vmem [#allocation1], 34
    %v1012 = vld [vmem:[%s1011] ss:$4 sm:$0xff]
    %v1013 = vrot.slane %v1009, 1
    %v1014 = vsel %vm938, %v1013, %v1013
    %v1015 = vsel %vm940, %v1013, %v1014
    %v1016 = vsel %vm943, %v1012, %v1015
    %v1017 = vsel %vm945, %v1012, %v1016
    %v1018 = vsel %vm947, %v1012, %v1017
    %v1019 = vsel %vm949, %v1012, %v1018
    %1021 = vst [vmem:[#allocation4 + $0xa] sm:$0x3] %v1019
    %1022 = vst.sshfl [vmem:[#allocation1] sm:$0xff pattern:$0x73625140] %v932
    %s1023 = scalar_lea.vmem [#allocation1], 3
    %v1024 = vld [vmem:[%s1023] ss:$4 sm:$0xff]
    %1025 = vst.sshfl [vmem:[#allocation1 + $0x20] sm:$0xff pattern:$0x73625140] %v934
    %s1026 = scalar_lea.vmem [#allocation1], 35
    %v1027 = vld [vmem:[%s1026] ss:$4 sm:$0xff]
    %v1028 = vsel %vm938, %v1024, %v1024
    %v1029 = vsel %vm940, %v1024, %v1028
    %v1030 = vrot.slane %v1027, 7
    %v1031 = vsel %vm943, %v1030, %v1029
    %v1032 = vsel %vm945, %v1030, %v1031
    %v1033 = vsel %vm947, %v1030, %v1032
    %v1034 = vsel %vm949, %v1030, %v1033
    %1036 = vst [vmem:[#allocation4 + $0xc] sm:$0x3] %v1034
    %1037 = vst.sshfl [vmem:[#allocation1] sm:$0xff pattern:$0x73625140] %v932
    %s1038 = scalar_lea.vmem [#allocation1], 3
    %v1039 = vld [vmem:[%s1038] ss:$4 sm:$0xff]
    %1040 = vst.sshfl [vmem:[#allocation1 + $0x20] sm:$0xff pattern:$0x73625140] %v934
    %s1041 = scalar_lea.vmem [#allocation1], 35
    %v1042 = vld [vmem:[%s1041] ss:$4 sm:$0xff]
    %v1043 = vrot.slane %v1039, 1
    %v1044 = vsel %vm938, %v1043, %v1043
    %v1045 = vsel %vm940, %v1043, %v1044
    %v1046 = vsel %vm943, %v1042, %v1045
    %v1047 = vsel %vm945, %v1042, %v1046
    %v1048 = vsel %vm947, %v1042, %v1047
    %v1049 = vsel %vm949, %v1042, %v1048
    %1051 = vst [vmem:[#allocation4 + $0xe] sm:$0x3] %v1049
    %v1054 = vsel %vm938, %v933, %v933
    %v1055 = vsel %vm940, %v933, %v1054
    %v1056 = vrot.slane %v935, 7
    %v1057 = vsel %vm943, %v1056, %v1055
    %v1058 = vsel %vm945, %v1056, %v1057
    %v1059 = vsel %vm947, %v1056, %v1058
    %v1060 = vsel %vm949, %v1056, %v1059
    %1062 = vst [vmem:[#allocation4 + $0x10] sm:$0x3] %v1060
    %v1063 = vrot.slane %v933, 1
    %v1064 = vsel %vm938, %v1063, %v1063
    %v1065 = vsel %vm940, %v1063, %v1064
    %v1066 = vsel %vm943, %v935, %v1065
    %v1067 = vsel %vm945, %v935, %v1066
    %v1068 = vsel %vm947, %v935, %v1067
    %v1069 = vsel %vm949, %v935, %v1068
    %1071 = vst [vmem:[#allocation4 + $0x12] sm:$0x3] %v1069
    %1072 = vst.sshfl [vmem:[#allocation1] sm:$0xff pattern:$0x73625140] %v933
    %s1073 = scalar_lea.vmem [#allocation1], 1
    %v1074 = vld [vmem:[%s1073] ss:$4 sm:$0xff]
    %1075 = vst.sshfl [vmem:[#allocation1 + $0x20] sm:$0xff pattern:$0x73625140] %v935
    %s1076 = scalar_lea.vmem [#allocation1], 33
    %v1077 = vld [vmem:[%s1076] ss:$4 sm:$0xff]
    %v1078 = vsel %vm938, %v1074, %v1074
    %v1079 = vsel %vm940, %v1074, %v1078
    %v1080 = vrot.slane %v1077, 7
    %v1081 = vsel %vm943, %v1080, %v1079
    %v1082 = vsel %vm945, %v1080, %v1081
    %v1083 = vsel %vm947, %v1080, %v1082
    %v1084 = vsel %vm949, %v1080, %v1083
    %1086 = vst [vmem:[#allocation4 + $0x14] sm:$0x3] %v1084
    %1087 = vst.sshfl [vmem:[#allocation1] sm:$0xff pattern:$0x73625140] %v933
    %s1088 = scalar_lea.vmem [#allocation1], 1
    %v1089 = vld [vmem:[%s1088] ss:$4 sm:$0xff]
    %1090 = vst.sshfl [vmem:[#allocation1 + $0x20] sm:$0xff pattern:$0x73625140] %v935
    %s1091 = scalar_lea.vmem [#allocation1], 33
    %v1092 = vld [vmem:[%s1091] ss:$4 sm:$0xff]
    %v1093 = vrot.slane %v1089, 1
    %v1094 = vsel %vm938, %v1093, %v1093
    %v1095 = vsel %vm940, %v1093, %v1094
    %v1096 = vsel %vm943, %v1092, %v1095
    %v1097 = vsel %vm945, %v1092, %v1096
    %v1098 = vsel %vm947, %v1092, %v1097
    %v1099 = vsel %vm949, %v1092, %v1098
    %1101 = vst [vmem:[#allocation4 + $0x16] sm:$0x3] %v1099
    %1102 = vst.sshfl [vmem:[#allocation1] sm:$0xff pattern:$0x73625140] %v933
    %s1103 = scalar_lea.vmem [#allocation1], 2
    %v1104 = vld [vmem:[%s1103] ss:$4 sm:$0xff]
    %1105 = vst.sshfl [vmem:[#allocation1 + $0x20] sm:$0xff pattern:$0x73625140] %v935
    %s1106 = scalar_lea.vmem [#allocation1], 34
    %v1107 = vld [vmem:[%s1106] ss:$4 sm:$0xff]
    %v1108 = vsel %vm938, %v1104, %v1104
    %v1109 = vsel %vm940, %v1104, %v1108
    %v1110 = vrot.slane %v1107, 7
    %v1111 = vsel %vm943, %v1110, %v1109
    %v1112 = vsel %vm945, %v1110, %v1111
    %v1113 = vsel %vm947, %v1110, %v1112
    %v1114 = vsel %vm949, %v1110, %v1113
    %1116 = vst [vmem:[#allocation4 + $0x18] sm:$0x3] %v1114
    %1117 = vst.sshfl [vmem:[#allocation1] sm:$0xff pattern:$0x73625140] %v933
    %s1118 = scalar_lea.vmem [#allocation1], 2
    %v1119 = vld [vmem:[%s1118] ss:$4 sm:$0xff]
    %1120 = vst.sshfl [vmem:[#allocation1 + $0x20] sm:$0xff pattern:$0x73625140] %v935
    %s1121 = scalar_lea.vmem [#allocation1], 34
    %v1122 = vld [vmem:[%s1121] ss:$4 sm:$0xff]
    %v1123 = vrot.slane %v1119, 1
    %v1124 = vsel %vm938, %v1123, %v1123
    %v1125 = vsel %vm940, %v1123, %v1124
    %v1126 = vsel %vm943, %v1122, %v1125
    %v1127 = vsel %vm945, %v1122, %v1126
    %v1128 = vsel %vm947, %v1122, %v1127
    %v1129 = vsel %vm949, %v1122, %v1128
    %1131 = vst [vmem:[#allocation4 + $0x1a] sm:$0x3] %v1129
    %1132 = vst.sshfl [vmem:[#allocation1] sm:$0xff pattern:$0x73625140] %v933
    %s1133 = scalar_lea.vmem [#allocation1], 3
    %v1134 = vld [vmem:[%s1133] ss:$4 sm:$0xff]
    %1135 = vst.sshfl [vmem:[#allocation1 + $0x20] sm:$0xff pattern:$0x73625140] %v935
    %s1136 = scalar_lea.vmem [#allocation1], 35
    %v1137 = vld [vmem:[%s1136] ss:$4 sm:$0xff]
    %v1138 = vsel %vm938, %v1134, %v1134
    %v1139 = vsel %vm940, %v1134, %v1138
    %v1140 = vrot.slane %v1137, 7
    %v1141 = vsel %vm943, %v1140, %v1139
    %v1142 = vsel %vm945, %v1140, %v1141
    %v1143 = vsel %vm947, %v1140, %v1142
    %v1144 = vsel %vm949, %v1140, %v1143
    %1146 = vst [vmem:[#allocation4 + $0x1c] sm:$0x3] %v1144
    %1147 = vst.sshfl [vmem:[#allocation1] sm:$0xff pattern:$0x73625140] %v933
    %s1148 = scalar_lea.vmem [#allocation1], 3
    %v1149 = vld [vmem:[%s1148] ss:$4 sm:$0xff]
    %1150 = vst.sshfl [vmem:[#allocation1 + $0x20] sm:$0xff pattern:$0x73625140] %v935
    %s1151 = scalar_lea.vmem [#allocation1], 35
    %v1152 = vld [vmem:[%s1151] ss:$4 sm:$0xff]
    %v1153 = vrot.slane %v1149, 1
    %v1154 = vsel %vm938, %v1153, %v1153
    %v1155 = vsel %vm940, %v1153, %v1154
    %v1156 = vsel %vm943, %v1152, %v1155
    %v1157 = vsel %vm945, %v1152, %v1156
    %v1158 = vsel %vm947, %v1152, %v1157
    %v1159 = vsel %vm949, %v1152, %v1158
    %1161 = vst [vmem:[#allocation4 + $0x1e] sm:$0x3] %v1159
    %v1162 = vld [vmem:[#allocation4] sm:$0xff]
    %v1163 = vld [vmem:[#allocation4 + $0x8] sm:$0xff]
    %v1164 = vld [vmem:[#allocation4 + $0x10] sm:$0xff]
    %v1165 = vld [vmem:[#allocation4 + $0x18] sm:$0xff]
    %v1166 = vld [vmem:[#allocation11] sm:$0xff]
    %v1167 = vld [vmem:[#allocation11 + $0x8] sm:$0xff]
    %v1168 = vld [vmem:[#allocation11 + $0x10] sm:$0xff]
    %v1169 = vld [vmem:[#allocation11 + $0x18] sm:$0xff]
    %v1170 = vld [vmem:[#allocation11 + $0x20] sm:$0xff]
    %v1171 = vld [vmem:[#allocation11 + $0x28] sm:$0xff]
    %v1172 = vld [vmem:[#allocation11 + $0x30] sm:$0xff]
    %v1173 = vld [vmem:[#allocation11 + $0x38] sm:$0xff]
    %v1174 = vld [vmem:[#allocation11 + $0x40] sm:$0xff]
    %v1175 = vld [vmem:[#allocation11 + $0x48] sm:$0xff]
    %v1176 = vld [vmem:[#allocation11 + $0x50] sm:$0xff]
    %v1177 = vld [vmem:[#allocation11 + $0x58] sm:$0xff]
    %v1178 = vld [vmem:[#allocation11 + $0x60] sm:$0xff]
    %v1179 = vld [vmem:[#allocation11 + $0x68] sm:$0xff]
    %v1180 = vld [vmem:[#allocation11 + $0x70] sm:$0xff]
    %v1181 = vld [vmem:[#allocation11 + $0x78] sm:$0xff]
    %v1182 = vld [vmem:[#allocation11 + $0x80] sm:$0xff]
    %v1183 = vld [vmem:[#allocation11 + $0x88] sm:$0xff]
    %v1184 = vld [vmem:[#allocation11 + $0x90] sm:$0xff]
    %v1185 = vld [vmem:[#allocation11 + $0x98] sm:$0xff]
    %v1186 = vld [vmem:[#allocation11 + $0xa0] sm:$0xff]
    %v1187 = vld [vmem:[#allocation11 + $0xa8] sm:$0xff]
    %v1188 = vld [vmem:[#allocation11 + $0xb0] sm:$0xff]
    %v1189 = vld [vmem:[#allocation11 + $0xb8] sm:$0xff]
    %v1190 = vld [vmem:[#allocation11 + $0xc0] sm:$0xff]
    %v1191 = vld [vmem:[#allocation11 + $0xc8] sm:$0xff]
    %v1192 = vld [vmem:[#allocation11 + $0xd0] sm:$0xff]
    %v1193 = vld [vmem:[#allocation11 + $0xd8] sm:$0xff]
    %v1194 = vld [vmem:[#allocation11 + $0xe0] sm:$0xff]
    %v1195 = vld [vmem:[#allocation11 + $0xe8] sm:$0xff]
    %v1196 = vld [vmem:[#allocation11 + $0xf0] sm:$0xff]
    %v1197 = vld [vmem:[#allocation11 + $0xf8] sm:$0xff]
    %v1198 = vld [vmem:[#allocation11 + $0x100] sm:$0xff]
    %v1199 = vld [vmem:[#allocation11 + $0x108] sm:$0xff]
    %v1200 = vld [vmem:[#allocation11 + $0x110] sm:$0xff]
    %v1201 = vld [vmem:[#allocation11 + $0x118] sm:$0xff]
    %v1202 = vld [vmem:[#allocation11 + $0x120] sm:$0xff]
    %v1203 = vld [vmem:[#allocation11 + $0x128] sm:$0xff]
    %v1204 = vld [vmem:[#allocation11 + $0x130] sm:$0xff]
    %v1205 = vld [vmem:[#allocation11 + $0x138] sm:$0xff]
    %v1206 = vld [vmem:[#allocation11 + $0x140] sm:$0xff]
    %v1207 = vld [vmem:[#allocation11 + $0x148] sm:$0xff]
    %v1208 = vld [vmem:[#allocation11 + $0x150] sm:$0xff]
    %v1209 = vld [vmem:[#allocation11 + $0x158] sm:$0xff]
    %v1210 = vld [vmem:[#allocation11 + $0x160] sm:$0xff]
    %v1211 = vld [vmem:[#allocation11 + $0x168] sm:$0xff]
    %v1212 = vld [vmem:[#allocation11 + $0x170] sm:$0xff]
    %v1213 = vld [vmem:[#allocation11 + $0x178] sm:$0xff]
    %v1214 = vld [vmem:[#allocation11 + $0x180] sm:$0xff]
    %v1215 = vld [vmem:[#allocation11 + $0x188] sm:$0xff]
    %v1216 = vld [vmem:[#allocation11 + $0x190] sm:$0xff]
    %v1217 = vld [vmem:[#allocation11 + $0x198] sm:$0xff]
    %v1218 = vld [vmem:[#allocation11 + $0x1a0] sm:$0xff]
    %v1219 = vld [vmem:[#allocation11 + $0x1a8] sm:$0xff]
    %v1220 = vld [vmem:[#allocation11 + $0x1b0] sm:$0xff]
    %v1221 = vld [vmem:[#allocation11 + $0x1b8] sm:$0xff]
    %v1222 = vld [vmem:[#allocation11 + $0x1c0] sm:$0xff]
    %v1223 = vld [vmem:[#allocation11 + $0x1c8] sm:$0xff]
    %v1224 = vld [vmem:[#allocation11 + $0x1d0] sm:$0xff]
    %v1225 = vld [vmem:[#allocation11 + $0x1d8] sm:$0xff]
    %v1226 = vld [vmem:[#allocation11 + $0x1e0] sm:$0xff]
    %v1227 = vld [vmem:[#allocation11 + $0x1e8] sm:$0xff]
    %v1228 = vld [vmem:[#allocation11 + $0x1f0] sm:$0xff]
    %v1229 = vld [vmem:[#allocation11 + $0x1f8] sm:$0xff]
    %v1230 = vld [vmem:[#allocation11 + $0x200] sm:$0xff]
    %v1231 = vld [vmem:[#allocation11 + $0x208] sm:$0xff]
    %v1232 = vld [vmem:[#allocation11 + $0x210] sm:$0xff]
    %v1233 = vld [vmem:[#allocation11 + $0x218] sm:$0xff]
    %v1234 = vld [vmem:[#allocation11 + $0x220] sm:$0xff]
    %v1235 = vld [vmem:[#allocation11 + $0x228] sm:$0xff]
    %v1236 = vld [vmem:[#allocation11 + $0x230] sm:$0xff]
    %v1237 = vld [vmem:[#allocation11 + $0x238] sm:$0xff]
    %v1238 = vld [vmem:[#allocation11 + $0x240] sm:$0xff]
    %v1239 = vld [vmem:[#allocation11 + $0x248] sm:$0xff]
    %v1240 = vld [vmem:[#allocation11 + $0x250] sm:$0xff]
    %v1241 = vld [vmem:[#allocation11 + $0x258] sm:$0xff]
    %v1242 = vld [vmem:[#allocation11 + $0x260] sm:$0xff]
    %v1243 = vld [vmem:[#allocation11 + $0x268] sm:$0xff]
    %v1244 = vld [vmem:[#allocation11 + $0x270] sm:$0xff]
    %v1245 = vld [vmem:[#allocation11 + $0x278] sm:$0xff]
    %v1246 = vld [vmem:[#allocation11 + $0x280] sm:$0xff]
    %v1247 = vld [vmem:[#allocation11 + $0x288] sm:$0xff]
    %v1248 = vld [vmem:[#allocation11 + $0x290] sm:$0xff]
    %v1249 = vld [vmem:[#allocation11 + $0x298] sm:$0xff]
    %v1250 = vld [vmem:[#allocation11 + $0x2a0] sm:$0xff]
    %v1251 = vld [vmem:[#allocation11 + $0x2a8] sm:$0xff]
    %v1252 = vld [vmem:[#allocation11 + $0x2b0] sm:$0xff]
    %v1253 = vld [vmem:[#allocation11 + $0x2b8] sm:$0xff]
    %v1254 = vld [vmem:[#allocation11 + $0x2c0] sm:$0xff]
    %v1255 = vld [vmem:[#allocation11 + $0x2c8] sm:$0xff]
    %v1256 = vld [vmem:[#allocation11 + $0x2d0] sm:$0xff]
    %v1257 = vld [vmem:[#allocation11 + $0x2d8] sm:$0xff]
    %v1258 = vld [vmem:[#allocation11 + $0x2e0] sm:$0xff]
    %v1259 = vld [vmem:[#allocation11 + $0x2e8] sm:$0xff]
    %v1260 = vld [vmem:[#allocation11 + $0x2f0] sm:$0xff]
    %v1261 = vld [vmem:[#allocation11 + $0x2f8] sm:$0xff]
    %v1262 = vld [vmem:[#allocation11 + $0x300] sm:$0xff]
    %v1263 = vld [vmem:[#allocation11 + $0x308] sm:$0xff]
    %v1264 = vld [vmem:[#allocation11 + $0x310] sm:$0xff]
    %v1265 = vld [vmem:[#allocation11 + $0x318] sm:$0xff]
    %v1266 = vld [vmem:[#allocation11 + $0x320] sm:$0xff]
    %v1267 = vld [vmem:[#allocation11 + $0x328] sm:$0xff]
    %v1268 = vld [vmem:[#allocation11 + $0x330] sm:$0xff]
    %v1269 = vld [vmem:[#allocation11 + $0x338] sm:$0xff]
    %v1270 = vld [vmem:[#allocation11 + $0x340] sm:$0xff]
    %v1271 = vld [vmem:[#allocation11 + $0x348] sm:$0xff]
    %v1272 = vld [vmem:[#allocation11 + $0x350] sm:$0xff]
    %v1273 = vld [vmem:[#allocation11 + $0x358] sm:$0xff]
    %v1274 = vld [vmem:[#allocation11 + $0x360] sm:$0xff]
    %v1275 = vld [vmem:[#allocation11 + $0x368] sm:$0xff]
    %v1276 = vld [vmem:[#allocation11 + $0x370] sm:$0xff]
    %v1277 = vld [vmem:[#allocation11 + $0x378] sm:$0xff]
    %v1278 = vld [vmem:[#allocation11 + $0x380] sm:$0xff]
    %v1279 = vld [vmem:[#allocation11 + $0x388] sm:$0xff]
    %v1280 = vld [vmem:[#allocation11 + $0x390] sm:$0xff]
    %v1281 = vld [vmem:[#allocation11 + $0x398] sm:$0xff]
    %v1282 = vld [vmem:[#allocation11 + $0x3a0] sm:$0xff]
    %v1283 = vld [vmem:[#allocation11 + $0x3a8] sm:$0xff]
    %v1284 = vld [vmem:[#allocation11 + $0x3b0] sm:$0xff]
    %v1285 = vld [vmem:[#allocation11 + $0x3b8] sm:$0xff]
    %v1286 = vld [vmem:[#allocation11 + $0x3c0] sm:$0xff]
    %v1287 = vld [vmem:[#allocation11 + $0x3c8] sm:$0xff]
    %v1288 = vld [vmem:[#allocation11 + $0x3d0] sm:$0xff]
    %v1289 = vld [vmem:[#allocation11 + $0x3d8] sm:$0xff]
    %v1290 = vld [vmem:[#allocation11 + $0x3e0] sm:$0xff]
    %v1291 = vld [vmem:[#allocation11 + $0x3e8] sm:$0xff]
    %v1292 = vld [vmem:[#allocation11 + $0x3f0] sm:$0xff]
    %v1293 = vld [vmem:[#allocation11 + $0x3f8] sm:$0xff]
    %v1294 = vld [vmem:[#allocation11 + $0x400] sm:$0xff]
    %v1295 = vld [vmem:[#allocation11 + $0x408] sm:$0xff]
    %v1296 = vld [vmem:[#allocation11 + $0x410] sm:$0xff]
    %v1297 = vld [vmem:[#allocation11 + $0x418] sm:$0xff]
    %v1298 = vld [vmem:[#allocation11 + $0x420] sm:$0xff]
    %v1299 = vld [vmem:[#allocation11 + $0x428] sm:$0xff]
    %v1300 = vld [vmem:[#allocation11 + $0x430] sm:$0xff]
    %v1301 = vld [vmem:[#allocation11 + $0x438] sm:$0xff]
    %v1302 = vld [vmem:[#allocation11 + $0x440] sm:$0xff]
    %v1303 = vld [vmem:[#allocation11 + $0x448] sm:$0xff]
    %v1304 = vld [vmem:[#allocation11 + $0x450] sm:$0xff]
    %v1305 = vld [vmem:[#allocation11 + $0x458] sm:$0xff]
    %v1306 = vld [vmem:[#allocation11 + $0x460] sm:$0xff]
    %v1307 = vld [vmem:[#allocation11 + $0x468] sm:$0xff]
    %v1308 = vld [vmem:[#allocation11 + $0x470] sm:$0xff]
    %v1309 = vld [vmem:[#allocation11 + $0x478] sm:$0xff]
    %v1310 = vld [vmem:[#allocation11 + $0x480] sm:$0xff]
    %v1311 = vld [vmem:[#allocation11 + $0x488] sm:$0xff]
    %v1312 = vld [vmem:[#allocation11 + $0x490] sm:$0xff]
    %v1313 = vld [vmem:[#allocation11 + $0x498] sm:$0xff]
    %v1314 = vld [vmem:[#allocation11 + $0x4a0] sm:$0xff]
    %v1315 = vld [vmem:[#allocation11 + $0x4a8] sm:$0xff]
    %v1316 = vld [vmem:[#allocation11 + $0x4b0] sm:$0xff]
    %v1317 = vld [vmem:[#allocation11 + $0x4b8] sm:$0xff]
    %v1318 = vld [vmem:[#allocation11 + $0x4c0] sm:$0xff]
    %v1319 = vld [vmem:[#allocation11 + $0x4c8] sm:$0xff]
    %v1320 = vld [vmem:[#allocation11 + $0x4d0] sm:$0xff]
    %v1321 = vld [vmem:[#allocation11 + $0x4d8] sm:$0xff]
    %v1322 = vld [vmem:[#allocation11 + $0x4e0] sm:$0xff]
    %v1323 = vld [vmem:[#allocation11 + $0x4e8] sm:$0xff]
    %v1324 = vld [vmem:[#allocation11 + $0x4f0] sm:$0xff]
    %v1325 = vld [vmem:[#allocation11 + $0x4f8] sm:$0xff]
    %v1326 = vld [vmem:[#allocation11 + $0x500] sm:$0xff]
    %v1327 = vld [vmem:[#allocation11 + $0x508] sm:$0xff]
    %v1328 = vld [vmem:[#allocation11 + $0x510] sm:$0xff]
    %v1329 = vld [vmem:[#allocation11 + $0x518] sm:$0xff]
    %v1330 = vld [vmem:[#allocation11 + $0x520] sm:$0xff]
    %v1331 = vld [vmem:[#allocation11 + $0x528] sm:$0xff]
    %v1332 = vld [vmem:[#allocation11 + $0x530] sm:$0xff]
    %v1333 = vld [vmem:[#allocation11 + $0x538] sm:$0xff]
    %v1334 = vld [vmem:[#allocation11 + $0x540] sm:$0xff]
    %v1335 = vld [vmem:[#allocation11 + $0x548] sm:$0xff]
    %v1336 = vld [vmem:[#allocation11 + $0x550] sm:$0xff]
    %v1337 = vld [vmem:[#allocation11 + $0x558] sm:$0xff]
    %v1338 = vld [vmem:[#allocation11 + $0x560] sm:$0xff]
    %v1339 = vld [vmem:[#allocation11 + $0x568] sm:$0xff]
    %v1340 = vld [vmem:[#allocation11 + $0x570] sm:$0xff]
    %v1341 = vld [vmem:[#allocation11 + $0x578] sm:$0xff]
    %v1342 = vld [vmem:[#allocation11 + $0x580] sm:$0xff]
    %v1343 = vld [vmem:[#allocation11 + $0x588] sm:$0xff]
    %v1344 = vld [vmem:[#allocation11 + $0x590] sm:$0xff]
    %v1345 = vld [vmem:[#allocation11 + $0x598] sm:$0xff]
    %v1346 = vld [vmem:[#allocation11 + $0x5a0] sm:$0xff]
    %v1347 = vld [vmem:[#allocation11 + $0x5a8] sm:$0xff]
    %v1348 = vld [vmem:[#allocation11 + $0x5b0] sm:$0xff]
    %v1349 = vld [vmem:[#allocation11 + $0x5b8] sm:$0xff]
    %v1350 = vld [vmem:[#allocation11 + $0x5c0] sm:$0xff]
    %v1351 = vld [vmem:[#allocation11 + $0x5c8] sm:$0xff]
    %v1352 = vld [vmem:[#allocation11 + $0x5d0] sm:$0xff]
    %v1353 = vld [vmem:[#allocation11 + $0x5d8] sm:$0xff]
    %v1354 = vld [vmem:[#allocation11 + $0x5e0] sm:$0xff]
    %v1355 = vld [vmem:[#allocation11 + $0x5e8] sm:$0xff]
    %v1356 = vld [vmem:[#allocation11 + $0x5f0] sm:$0xff]
    %v1357 = vld [vmem:[#allocation11 + $0x5f8] sm:$0xff]
    %v1358 = vld [vmem:[#allocation11 + $0x600] sm:$0xff]
    %v1359 = vld [vmem:[#allocation11 + $0x608] sm:$0xff]
    %v1360 = vld [vmem:[#allocation11 + $0x610] sm:$0xff]
    %v1361 = vld [vmem:[#allocation11 + $0x618] sm:$0xff]
    %v1362 = vld [vmem:[#allocation11 + $0x620] sm:$0xff]
    %v1363 = vld [vmem:[#allocation11 + $0x628] sm:$0xff]
    %v1364 = vld [vmem:[#allocation11 + $0x630] sm:$0xff]
    %v1365 = vld [vmem:[#allocation11 + $0x638] sm:$0xff]
    %v1366 = vld [vmem:[#allocation11 + $0x640] sm:$0xff]
    %v1367 = vld [vmem:[#allocation11 + $0x648] sm:$0xff]
    %v1368 = vld [vmem:[#allocation11 + $0x650] sm:$0xff]
    %v1369 = vld [vmem:[#allocation11 + $0x658] sm:$0xff]
    %v1370 = vld [vmem:[#allocation11 + $0x660] sm:$0xff]
    %v1371 = vld [vmem:[#allocation11 + $0x668] sm:$0xff]
    %v1372 = vld [vmem:[#allocation11 + $0x670] sm:$0xff]
    %v1373 = vld [vmem:[#allocation11 + $0x678] sm:$0xff]
    %v1374 = vld [vmem:[#allocation11 + $0x680] sm:$0xff]
    %v1375 = vld [vmem:[#allocation11 + $0x688] sm:$0xff]
    %v1376 = vld [vmem:[#allocation11 + $0x690] sm:$0xff]
    %v1377 = vld [vmem:[#allocation11 + $0x698] sm:$0xff]
    %v1378 = vld [vmem:[#allocation11 + $0x6a0] sm:$0xff]
    %v1379 = vld [vmem:[#allocation11 + $0x6a8] sm:$0xff]
    %v1380 = vld [vmem:[#allocation11 + $0x6b0] sm:$0xff]
    %v1381 = vld [vmem:[#allocation11 + $0x6b8] sm:$0xff]
    %v1382 = vld [vmem:[#allocation11 + $0x6c0] sm:$0xff]
    %v1383 = vld [vmem:[#allocation11 + $0x6c8] sm:$0xff]
    %v1384 = vld [vmem:[#allocation11 + $0x6d0] sm:$0xff]
    %v1385 = vld [vmem:[#allocation11 + $0x6d8] sm:$0xff]
    %v1386 = vld [vmem:[#allocation11 + $0x6e0] sm:$0xff]
    %v1387 = vld [vmem:[#allocation11 + $0x6e8] sm:$0xff]
    %v1388 = vld [vmem:[#allocation11 + $0x6f0] sm:$0xff]
    %v1389 = vld [vmem:[#allocation11 + $0x6f8] sm:$0xff]
    %v1390 = vld [vmem:[#allocation11 + $0x700] sm:$0xff]
    %v1391 = vld [vmem:[#allocation11 + $0x708] sm:$0xff]
    %v1392 = vld [vmem:[#allocation11 + $0x710] sm:$0xff]
    %v1393 = vld [vmem:[#allocation11 + $0x718] sm:$0xff]
    %v1394 = vld [vmem:[#allocation11 + $0x720] sm:$0xff]
    %v1395 = vld [vmem:[#allocation11 + $0x728] sm:$0xff]
    %v1396 = vld [vmem:[#allocation11 + $0x730] sm:$0xff]
    %v1397 = vld [vmem:[#allocation11 + $0x738] sm:$0xff]
    %v1398 = vld [vmem:[#allocation11 + $0x740] sm:$0xff]
    %v1399 = vld [vmem:[#allocation11 + $0x748] sm:$0xff]
    %v1400 = vld [vmem:[#allocation11 + $0x750] sm:$0xff]
    %v1401 = vld [vmem:[#allocation11 + $0x758] sm:$0xff]
    %v1402 = vld [vmem:[#allocation11 + $0x760] sm:$0xff]
    %v1403 = vld [vmem:[#allocation11 + $0x768] sm:$0xff]
    %v1404 = vld [vmem:[#allocation11 + $0x770] sm:$0xff]
    %v1405 = vld [vmem:[#allocation11 + $0x778] sm:$0xff]
    %v1406 = vld [vmem:[#allocation11 + $0x780] sm:$0xff]
    %v1407 = vld [vmem:[#allocation11 + $0x788] sm:$0xff]
    %v1408 = vld [vmem:[#allocation11 + $0x790] sm:$0xff]
    %v1409 = vld [vmem:[#allocation11 + $0x798] sm:$0xff]
    %v1410 = vld [vmem:[#allocation11 + $0x7a0] sm:$0xff]
    %v1411 = vld [vmem:[#allocation11 + $0x7a8] sm:$0xff]
    %v1412 = vld [vmem:[#allocation11 + $0x7b0] sm:$0xff]
    %v1413 = vld [vmem:[#allocation11 + $0x7b8] sm:$0xff]
    %v1414 = vld [vmem:[#allocation11 + $0x7c0] sm:$0xff]
    %v1415 = vld [vmem:[#allocation11 + $0x7c8] sm:$0xff]
    %v1416 = vld [vmem:[#allocation11 + $0x7d0] sm:$0xff]
    %v1417 = vld [vmem:[#allocation11 + $0x7d8] sm:$0xff]
    %v1418 = vld [vmem:[#allocation11 + $0x7e0] sm:$0xff]
    %v1419 = vld [vmem:[#allocation11 + $0x7e8] sm:$0xff]
    %v1420 = vld [vmem:[#allocation11 + $0x7f0] sm:$0xff]
    %v1421 = vld [vmem:[#allocation11 + $0x7f8] sm:$0xff]
    %v1422 = vld [vmem:[%s10] sm:$0x1]
    %v1424 = vperm.slane %v1422, 0
    %1430 = vst [vmem:[#allocation1] ss:$4 sm:$0xff] %v1162
    %s1431 = scalar_lea.vmem [#allocation1], 32
    %1432 = vst [vmem:[%s1431] ss:$4 sm:$0xff] %v1163
    %v1433 = vld.sshfl [vmem:[#allocation1] sm:$0xff pattern:$0x73625140]
    %v1434 = vld.sshfl [vmem:[#allocation1 + $0x8] sm:$0xff pattern:$0x73625140]
    %v1435 = vld.sshfl [vmem:[#allocation1 + $0x10] sm:$0xff pattern:$0x73625140]
    %v1436 = vld.sshfl [vmem:[#allocation1 + $0x18] sm:$0xff pattern:$0x73625140]
    %v1437 = vld.sshfl [vmem:[#allocation1 + $0x20] sm:$0xff pattern:$0x73625140]
    %v1438 = vld.sshfl [vmem:[#allocation1 + $0x28] sm:$0xff pattern:$0x73625140]
    %v1439 = vld.sshfl [vmem:[#allocation1 + $0x30] sm:$0xff pattern:$0x73625140]
    %v1440 = vld.sshfl [vmem:[#allocation1 + $0x38] sm:$0xff pattern:$0x73625140]
    %1441 = vst [vmem:[#allocation1] ss:$4 sm:$0xff] %v1164
    %1442 = vst [vmem:[%s1431] ss:$4 sm:$0xff] %v1165
    %v1443 = vld.sshfl [vmem:[#allocation1] sm:$0xff pattern:$0x73625140]
    %v1444 = vld.sshfl [vmem:[#allocation1 + $0x8] sm:$0xff pattern:$0x73625140]
    %v1445 = vld.sshfl [vmem:[#allocation1 + $0x10] sm:$0xff pattern:$0x73625140]
    %v1446 = vld.sshfl [vmem:[#allocation1 + $0x18] sm:$0xff pattern:$0x73625140]
    %v1447 = vld.sshfl [vmem:[#allocation1 + $0x20] sm:$0xff pattern:$0x73625140]
    %v1448 = vld.sshfl [vmem:[#allocation1 + $0x28] sm:$0xff pattern:$0x73625140]
    %v1449 = vld.sshfl [vmem:[#allocation1 + $0x30] sm:$0xff pattern:$0x73625140]
    %v1450 = vld.sshfl [vmem:[#allocation1 + $0x38] sm:$0xff pattern:$0x73625140]
    %1467 = vmatpush.msra.mxu0 %v1181
    %1468 = vmatpush.msra.mxu0 %v1180
    %1469 = vmatpush.msra.mxu0 %v1179
    %1470 = vmatpush.msra.mxu0 %v1178
    %1471 = vmatpush.msra.mxu0 %v1177
    %1472 = vmatpush.msra.mxu0 %v1176
    %1473 = vmatpush.msra.mxu0 %v1175
    %1474 = vmatpush.msra.mxu0 %v1174
    %1475 = vmatpush.msra.mxu0 %v1173
    %1476 = vmatpush.msra.mxu0 %v1172
    %1477 = vmatpush.msra.mxu0 %v1171
    %1478 = vmatpush.msra.mxu0 %v1170
    %1479 = vmatpush.msra.mxu0 %v1169
    %1480 = vmatpush.msra.mxu0 %v1168
    %1481 = vmatpush.msra.mxu0 %v1167
    %1482 = vmatpush.msra.mxu0 %v1166
    %1483 = vmatmul.f32.gmra.mxu0 %v1433
    %v1484 = vpop.f32.mrf.mxu0
    %v1485 = vadd.f32 %v1424, %v1484
    %1486 = vdwg.mxu0
    %1487 = vmatpush.msra.mxu0 %v1197
    %1488 = vmatpush.msra.mxu0 %v1196
    %1489 = vmatpush.msra.mxu0 %v1195
    %1490 = vmatpush.msra.mxu0 %v1194
    %1491 = vmatpush.msra.mxu0 %v1193
    %1492 = vmatpush.msra.mxu0 %v1192
    %1493 = vmatpush.msra.mxu0 %v1191
    %1494 = vmatpush.msra.mxu0 %v1190
    %1495 = vmatpush.msra.mxu0 %v1189
    %1496 = vmatpush.msra.mxu0 %v1188
    %1497 = vmatpush.msra.mxu0 %v1187
    %1498 = vmatpush.msra.mxu0 %v1186
    %1499 = vmatpush.msra.mxu0 %v1185
    %1500 = vmatpush.msra.mxu0 %v1184
    %1501 = vmatpush.msra.mxu0 %v1183
    %1502 = vmatpush.msra.mxu0 %v1182
    %1503 = vmatmul.f32.gmra.mxu0 %v1434
    %v1504 = vpop.f32.mrf.mxu0
    %v1505 = vadd.f32 %v1485, %v1504
    %1506 = vdwg.mxu0
    %1507 = vmatpush.msra.mxu0 %v1213
    %1508 = vmatpush.msra.mxu0 %v1212
    %1509 = vmatpush.msra.mxu0 %v1211
    %1510 = vmatpush.msra.mxu0 %v1210
    %1511 = vmatpush.msra.mxu0 %v1209
    %1512 = vmatpush.msra.mxu0 %v1208
    %1513 = vmatpush.msra.mxu0 %v1207
    %1514 = vmatpush.msra.mxu0 %v1206
    %1515 = vmatpush.msra.mxu0 %v1205
    %1516 = vmatpush.msra.mxu0 %v1204
    %1517 = vmatpush.msra.mxu0 %v1203
    %1518 = vmatpush.msra.mxu0 %v1202
    %1519 = vmatpush.msra.mxu0 %v1201
    %1520 = vmatpush.msra.mxu0 %v1200
    %1521 = vmatpush.msra.mxu0 %v1199
    %1522 = vmatpush.msra.mxu0 %v1198
    %1523 = vmatmul.f32.gmra.mxu0 %v1435
    %v1524 = vpop.f32.mrf.mxu0
    %v1525 = vadd.f32 %v1505, %v1524
    %1526 = vdwg.mxu0
    %1527 = vmatpush.msra.mxu0 %v1229
    %1528 = vmatpush.msra.mxu0 %v1228
    %1529 = vmatpush.msra.mxu0 %v1227
    %1530 = vmatpush.msra.mxu0 %v1226
    %1531 = vmatpush.msra.mxu0 %v1225
    %1532 = vmatpush.msra.mxu0 %v1224
    %1533 = vmatpush.msra.mxu0 %v1223
    %1534 = vmatpush.msra.mxu0 %v1222
    %1535 = vmatpush.msra.mxu0 %v1221
    %1536 = vmatpush.msra.mxu0 %v1220
    %1537 = vmatpush.msra.mxu0 %v1219
    %1538 = vmatpush.msra.mxu0 %v1218
    %1539 = vmatpush.msra.mxu0 %v1217
    %1540 = vmatpush.msra.mxu0 %v1216
    %1541 = vmatpush.msra.mxu0 %v1215
    %1542 = vmatpush.msra.mxu0 %v1214
    %1543 = vmatmul.f32.gmra.mxu0 %v1436
    %v1544 = vpop.f32.mrf.mxu0
    %v1545 = vadd.f32 %v1525, %v1544
    %1546 = vdwg.mxu0
    %1547 = vmatpush.msra.mxu0 %v1245
    %1548 = vmatpush.msra.mxu0 %v1244
    %1549 = vmatpush.msra.mxu0 %v1243
    %1550 = vmatpush.msra.mxu0 %v1242
    %1551 = vmatpush.msra.mxu0 %v1241
    %1552 = vmatpush.msra.mxu0 %v1240
    %1553 = vmatpush.msra.mxu0 %v1239
    %1554 = vmatpush.msra.mxu0 %v1238
    %1555 = vmatpush.msra.mxu0 %v1237
    %1556 = vmatpush.msra.mxu0 %v1236
    %1557 = vmatpush.msra.mxu0 %v1235
    %1558 = vmatpush.msra.mxu0 %v1234
    %1559 = vmatpush.msra.mxu0 %v1233
    %1560 = vmatpush.msra.mxu0 %v1232
    %1561 = vmatpush.msra.mxu0 %v1231
    %1562 = vmatpush.msra.mxu0 %v1230
    %1563 = vmatmul.f32.gmra.mxu0 %v1437
    %v1564 = vpop.f32.mrf.mxu0
    %v1565 = vadd.f32 %v1545, %v1564
    %1566 = vdwg.mxu0
    %1567 = vmatpush.msra.mxu0 %v1261
    %1568 = vmatpush.msra.mxu0 %v1260
    %1569 = vmatpush.msra.mxu0 %v1259
    %1570 = vmatpush.msra.mxu0 %v1258
    %1571 = vmatpush.msra.mxu0 %v1257
    %1572 = vmatpush.msra.mxu0 %v1256
    %1573 = vmatpush.msra.mxu0 %v1255
    %1574 = vmatpush.msra.mxu0 %v1254
    %1575 = vmatpush.msra.mxu0 %v1253
    %1576 = vmatpush.msra.mxu0 %v1252
    %1577 = vmatpush.msra.mxu0 %v1251
    %1578 = vmatpush.msra.mxu0 %v1250
    %1579 = vmatpush.msra.mxu0 %v1249
    %1580 = vmatpush.msra.mxu0 %v1248
    %1581 = vmatpush.msra.mxu0 %v1247
    %1582 = vmatpush.msra.mxu0 %v1246
    %1583 = vmatmul.f32.gmra.mxu0 %v1438
    %v1584 = vpop.f32.mrf.mxu0
    %v1585 = vadd.f32 %v1565, %v1584
    %1586 = vdwg.mxu0
    %1587 = vmatpush.msra.mxu0 %v1277
    %1588 = vmatpush.msra.mxu0 %v1276
    %1589 = vmatpush.msra.mxu0 %v1275
    %1590 = vmatpush.msra.mxu0 %v1274
    %1591 = vmatpush.msra.mxu0 %v1273
    %1592 = vmatpush.msra.mxu0 %v1272
    %1593 = vmatpush.msra.mxu0 %v1271
    %1594 = vmatpush.msra.mxu0 %v1270
    %1595 = vmatpush.msra.mxu0 %v1269
    %1596 = vmatpush.msra.mxu0 %v1268
    %1597 = vmatpush.msra.mxu0 %v1267
    %1598 = vmatpush.msra.mxu0 %v1266
    %1599 = vmatpush.msra.mxu0 %v1265
    %1600 = vmatpush.msra.mxu0 %v1264
    %1601 = vmatpush.msra.mxu0 %v1263
    %1602 = vmatpush.msra.mxu0 %v1262
    %1603 = vmatmul.f32.gmra.mxu0 %v1439
    %v1604 = vpop.f32.mrf.mxu0
    %v1605 = vadd.f32 %v1585, %v1604
    %1606 = vdwg.mxu0
    %1607 = vmatpush.msra.mxu0 %v1293
    %1608 = vmatpush.msra.mxu0 %v1292
    %1609 = vmatpush.msra.mxu0 %v1291
    %1610 = vmatpush.msra.mxu0 %v1290
    %1611 = vmatpush.msra.mxu0 %v1289
    %1612 = vmatpush.msra.mxu0 %v1288
    %1613 = vmatpush.msra.mxu0 %v1287
    %1614 = vmatpush.msra.mxu0 %v1286
    %1615 = vmatpush.msra.mxu0 %v1285
    %1616 = vmatpush.msra.mxu0 %v1284
    %1617 = vmatpush.msra.mxu0 %v1283
    %1618 = vmatpush.msra.mxu0 %v1282
    %1619 = vmatpush.msra.mxu0 %v1281
    %1620 = vmatpush.msra.mxu0 %v1280
    %1621 = vmatpush.msra.mxu0 %v1279
    %1622 = vmatpush.msra.mxu0 %v1278
    %1623 = vmatmul.f32.gmra.mxu0 %v1440
    %v1624 = vpop.f32.mrf.mxu0
    %v1625 = vadd.f32 %v1605, %v1624
    %1626 = vdwg.mxu0
    %1627 = vmatpush.msra.mxu0 %v1309
    %1628 = vmatpush.msra.mxu0 %v1308
    %1629 = vmatpush.msra.mxu0 %v1307
    %1630 = vmatpush.msra.mxu0 %v1306
    %1631 = vmatpush.msra.mxu0 %v1305
    %1632 = vmatpush.msra.mxu0 %v1304
    %1633 = vmatpush.msra.mxu0 %v1303
    %1634 = vmatpush.msra.mxu0 %v1302
    %1635 = vmatpush.msra.mxu0 %v1301
    %1636 = vmatpush.msra.mxu0 %v1300
    %1637 = vmatpush.msra.mxu0 %v1299
    %1638 = vmatpush.msra.mxu0 %v1298
    %1639 = vmatpush.msra.mxu0 %v1297
    %1640 = vmatpush.msra.mxu0 %v1296
    %1641 = vmatpush.msra.mxu0 %v1295
    %1642 = vmatpush.msra.mxu0 %v1294
    %1643 = vmatmul.f32.gmra.mxu0 %v1443
    %v1644 = vpop.f32.mrf.mxu0
    %v1645 = vadd.f32 %v1625, %v1644
    %1646 = vdwg.mxu0
    %1647 = vmatpush.msra.mxu0 %v1325
    %1648 = vmatpush.msra.mxu0 %v1324
    %1649 = vmatpush.msra.mxu0 %v1323
    %1650 = vmatpush.msra.mxu0 %v1322
    %1651 = vmatpush.msra.mxu0 %v1321
    %1652 = vmatpush.msra.mxu0 %v1320
    %1653 = vmatpush.msra.mxu0 %v1319
    %1654 = vmatpush.msra.mxu0 %v1318
    %1655 = vmatpush.msra.mxu0 %v1317
    %1656 = vmatpush.msra.mxu0 %v1316
    %1657 = vmatpush.msra.mxu0 %v1315
    %1658 = vmatpush.msra.mxu0 %v1314
    %1659 = vmatpush.msra.mxu0 %v1313
    %1660 = vmatpush.msra.mxu0 %v1312
    %1661 = vmatpush.msra.mxu0 %v1311
    %1662 = vmatpush.msra.mxu0 %v1310
    %1663 = vmatmul.f32.gmra.mxu0 %v1444
    %v1664 = vpop.f32.mrf.mxu0
    %v1665 = vadd.f32 %v1645, %v1664
    %1666 = vdwg.mxu0
    %1667 = vmatpush.msra.mxu0 %v1341
    %1668 = vmatpush.msra.mxu0 %v1340
    %1669 = vmatpush.msra.mxu0 %v1339
    %1670 = vmatpush.msra.mxu0 %v1338
    %1671 = vmatpush.msra.mxu0 %v1337
    %1672 = vmatpush.msra.mxu0 %v1336
    %1673 = vmatpush.msra.mxu0 %v1335
    %1674 = vmatpush.msra.mxu0 %v1334
    %1675 = vmatpush.msra.mxu0 %v1333
    %1676 = vmatpush.msra.mxu0 %v1332
    %1677 = vmatpush.msra.mxu0 %v1331
    %1678 = vmatpush.msra.mxu0 %v1330
    %1679 = vmatpush.msra.mxu0 %v1329
    %1680 = vmatpush.msra.mxu0 %v1328
    %1681 = vmatpush.msra.mxu0 %v1327
    %1682 = vmatpush.msra.mxu0 %v1326
    %1683 = vmatmul.f32.gmra.mxu0 %v1445
    %v1684 = vpop.f32.mrf.mxu0
    %v1685 = vadd.f32 %v1665, %v1684
    %1686 = vdwg.mxu0
    %1687 = vmatpush.msra.mxu0 %v1357
    %1688 = vmatpush.msra.mxu0 %v1356
    %1689 = vmatpush.msra.mxu0 %v1355
    %1690 = vmatpush.msra.mxu0 %v1354
    %1691 = vmatpush.msra.mxu0 %v1353
    %1692 = vmatpush.msra.mxu0 %v1352
    %1693 = vmatpush.msra.mxu0 %v1351
    %1694 = vmatpush.msra.mxu0 %v1350
    %1695 = vmatpush.msra.mxu0 %v1349
    %1696 = vmatpush.msra.mxu0 %v1348
    %1697 = vmatpush.msra.mxu0 %v1347
    %1698 = vmatpush.msra.mxu0 %v1346
    %1699 = vmatpush.msra.mxu0 %v1345
    %1700 = vmatpush.msra.mxu0 %v1344
    %1701 = vmatpush.msra.mxu0 %v1343
    %1702 = vmatpush.msra.mxu0 %v1342
    %1703 = vmatmul.f32.gmra.mxu0 %v1446
    %v1704 = vpop.f32.mrf.mxu0
    %v1705 = vadd.f32 %v1685, %v1704
    %1706 = vdwg.mxu0
    %1707 = vmatpush.msra.mxu0 %v1373
    %1708 = vmatpush.msra.mxu0 %v1372
    %1709 = vmatpush.msra.mxu0 %v1371
    %1710 = vmatpush.msra.mxu0 %v1370
    %1711 = vmatpush.msra.mxu0 %v1369
    %1712 = vmatpush.msra.mxu0 %v1368
    %1713 = vmatpush.msra.mxu0 %v1367
    %1714 = vmatpush.msra.mxu0 %v1366
    %1715 = vmatpush.msra.mxu0 %v1365
    %1716 = vmatpush.msra.mxu0 %v1364
    %1717 = vmatpush.msra.mxu0 %v1363
    %1718 = vmatpush.msra.mxu0 %v1362
    %1719 = vmatpush.msra.mxu0 %v1361
    %1720 = vmatpush.msra.mxu0 %v1360
    %1721 = vmatpush.msra.mxu0 %v1359
    %1722 = vmatpush.msra.mxu0 %v1358
    %1723 = vmatmul.f32.gmra.mxu0 %v1447
    %v1724 = vpop.f32.mrf.mxu0
    %v1725 = vadd.f32 %v1705, %v1724
    %1726 = vdwg.mxu0
    %1727 = vmatpush.msra.mxu0 %v1389
    %1728 = vmatpush.msra.mxu0 %v1388
    %1729 = vmatpush.msra.mxu0 %v1387
    %1730 = vmatpush.msra.mxu0 %v1386
    %1731 = vmatpush.msra.mxu0 %v1385
    %1732 = vmatpush.msra.mxu0 %v1384
    %1733 = vmatpush.msra.mxu0 %v1383
    %1734 = vmatpush.msra.mxu0 %v1382
    %1735 = vmatpush.msra.mxu0 %v1381
    %1736 = vmatpush.msra.mxu0 %v1380
    %1737 = vmatpush.msra.mxu0 %v1379
    %1738 = vmatpush.msra.mxu0 %v1378
    %1739 = vmatpush.msra.mxu0 %v1377
    %1740 = vmatpush.msra.mxu0 %v1376
    %1741 = vmatpush.msra.mxu0 %v1375
    %1742 = vmatpush.msra.mxu0 %v1374
    %1743 = vmatmul.f32.gmra.mxu0 %v1448
    %v1744 = vpop.f32.mrf.mxu0
    %v1745 = vadd.f32 %v1725, %v1744
    %1746 = vdwg.mxu0
    %1747 = vmatpush.msra.mxu0 %v1405
    %1748 = vmatpush.msra.mxu0 %v1404
    %1749 = vmatpush.msra.mxu0 %v1403
    %1750 = vmatpush.msra.mxu0 %v1402
    %1751 = vmatpush.msra.mxu0 %v1401
    %1752 = vmatpush.msra.mxu0 %v1400
    %1753 = vmatpush.msra.mxu0 %v1399
    %1754 = vmatpush.msra.mxu0 %v1398
    %1755 = vmatpush.msra.mxu0 %v1397
    %1756 = vmatpush.msra.mxu0 %v1396
    %1757 = vmatpush.msra.mxu0 %v1395
    %1758 = vmatpush.msra.mxu0 %v1394
    %1759 = vmatpush.msra.mxu0 %v1393
    %1760 = vmatpush.msra.mxu0 %v1392
    %1761 = vmatpush.msra.mxu0 %v1391
    %1762 = vmatpush.msra.mxu0 %v1390
    %1763 = vmatmul.f32.gmra.mxu0 %v1449
    %v1764 = vpop.f32.mrf.mxu0
    %v1765 = vadd.f32 %v1745, %v1764
    %1766 = vdwg.mxu0
    %1767 = vmatpush.msra.mxu0 %v1421
    %1768 = vmatpush.msra.mxu0 %v1420
    %1769 = vmatpush.msra.mxu0 %v1419
    %1770 = vmatpush.msra.mxu0 %v1418
    %1771 = vmatpush.msra.mxu0 %v1417
    %1772 = vmatpush.msra.mxu0 %v1416
    %1773 = vmatpush.msra.mxu0 %v1415
    %1774 = vmatpush.msra.mxu0 %v1414
    %1775 = vmatpush.msra.mxu0 %v1413
    %1776 = vmatpush.msra.mxu0 %v1412
    %1777 = vmatpush.msra.mxu0 %v1411
    %1778 = vmatpush.msra.mxu0 %v1410
    %1779 = vmatpush.msra.mxu0 %v1409
    %1780 = vmatpush.msra.mxu0 %v1408
    %1781 = vmatpush.msra.mxu0 %v1407
    %1782 = vmatpush.msra.mxu0 %v1406
    %1783 = vmatmul.f32.gmra.mxu0 %v1450
    %v1784 = vpop.f32.mrf.mxu0
    %v1785 = vadd.f32 %v1765, %v1784
    %1786 = vdwg.mxu0
    %v1787 = vmax.f32 %v1785, 0.0
    %v1788 = vld [vmem:[%s11] sm:$0x1]
    %v1790 = vperm.slane %v1788, 0
    %v1792 = vmul.f32 %v1787, %v1790
    %vm1793 = vcmask 517120
    %v1794 = vsel %vm1793, %v1792, 0.0
    %1795 = vadd.xlane.f32.xlu0 %v1794
    %v1796 = vpop.xlane.xlu0 %1795
    %v1797 = vld [vmem:[#allocation5] sm:$0x1]
    %v1799 = vperm.slane %v1797, 0
    %v1801 = vadd.f32 %v1796, %v1799
    %vm1802 = vcmask 1024
    %1803 = vst.msk [vmem:[%s13] sm:$0x3] %vm1802, %v1801
    // Predicated region
    $region70: #{_lambda_.1} parent=1 // pred_check
      _
    $region71: #{_lambda_.1} parent=1 // pred_check_branch
      %1805 = sbr.rel (0) target = $region73
    $region72: #{_lambda_.1} parent=1 // pred_region
      _
    $region73: #{_lambda_.1} parent=1 // pred_fallthru
      _
    // Predicated region
    $region74: #{_lambda_.1} parent=1 // pred_check
      _
    $region75: #{_lambda_.1} parent=1 // pred_check_branch
      %1807 = sbr.rel (0) target = $region77
    $region76: #{_lambda_.1} parent=1 // pred_region
      _
    $region77: #{_lambda_.1} parent=1 // pred_fallthru
      _
    %1808 = vsyncpa [#allocation7], 1
    %1809 = vsyncpa [#allocation9], 1
    %1810 = vsyncpa [#allocation12], 1

</llo_original>
